<compile_context>
chip_gen: v7x
topology: tpu7x:2x2x1
jax: 0.10.0
libtpu: 0.0.40
codegen_flags: <defaults>
</compile_context>

<pallas_src>
import functools

import jax
import jax.numpy as jnp
import numpy as np
from jax.experimental import pallas as pl
from jax.experimental.pallas import tpu as pltpu


# ----------------------------------------------------------------------------
# Fused MHA kernel
#   q/k/v refs : (1, S, E) blocks of the (B, S, E) inputs (no host transposes)
#   wq/wk/wv   : (E, E) block-diagonal per-head weights, (in, out) orientation,
#                1/sqrt(D) folded into wq host-side
#   wo         : (E, E) fc_out weight in (in, out) orientation
#   b          : (1, E) fc_out bias (f32)
# ----------------------------------------------------------------------------
def _fused_mha_kernel(q_ref, k_ref, v_ref, wq_ref, wk_ref, wv_ref,
                      wo_ref, b_ref, o_ref, *, n_heads, mxu_dtype):
    S = q_ref.shape[1]
    E = q_ref.shape[2]
    D = E // n_heads

    q = q_ref[0]                      # (S, E)
    k = k_ref[0]
    v = v_ref[0]

    # One lane-dense (S,E)@(E,E) matmul per projection (all heads at once);
    # natural contraction, no in-kernel weight transpose.
    qp = jnp.dot(q, wq_ref[...], preferred_element_type=jnp.float32)
    kp = jnp.dot(k, wk_ref[...], preferred_element_type=jnp.float32)
    vp = jnp.dot(v, wv_ref[...], preferred_element_type=jnp.float32)

    # MXU operands in the (optionally lower-precision) compute dtype; softmax
    # math stays in f32 (v5e's VPU/EUP have no bf16 path anyway).
    qp = qp.astype(mxu_dtype)
    kp = kp.astype(mxu_dtype)
    vp = vp.astype(mxu_dtype)
    wo = wo_ref[...]

    acc = jnp.zeros((S, E), dtype=jnp.float32)
    # Static unroll over heads: all heads handled inside one grid step.
    for h in range(n_heads):
        lo = h * D
        qh = qp[:, lo:lo + D]                                        # (S, D)
        kh = kp[:, lo:lo + D]
        vh = vp[:, lo:lo + D]

        # Scores (1/sqrt(D) already folded into Wq); stable softmax in f32;
        # denominator reciprocal goes to the otherwise-idle EUP slot.
        s = jnp.dot(qh, kh.T, preferred_element_type=jnp.float32)    # (S, S)
        s = s - jnp.max(s, axis=-1, keepdims=True)
        p = jnp.exp(s)
        p = p * pl.reciprocal(jnp.sum(p, axis=-1, keepdims=True), approx=True)

        ctx = jnp.dot(p.astype(mxu_dtype), vh,
                      preferred_element_type=jnp.float32)            # (S, D)
        # Fused fc_out: this head's (S,D) @ (D,E) slab of W_out^T, accumulated
        # so the merged activation never materializes in HBM.
        acc = acc + jnp.dot(ctx.astype(mxu_dtype), wo[lo:lo + D, :],
                            preferred_element_type=jnp.float32)

    o_ref[0] = (acc + b_ref[...]).astype(o_ref.dtype)
    # NOTE: for long sequences the (S,S) score tile should be KV-tiled
    # (flash-style online softmax with m/l/acc scratch) to keep VMEM bounded;
    # at the shapes this module targets the full-S tile fits comfortably.


def _prepare_weights(params, n_heads, mxu_dtype):
    """Host-side, one-time weight re-layout (outside the hot loop)."""
    wq, wk, wv = params["wq"], params["wk"], params["wv"]
    D = wq.shape[0]
    eye = jnp.eye(n_heads, dtype=wq.dtype)
    scale = np.float32(1.0 / np.sqrt(np.float32(D)))
    # kron(I_H, W.T) = block-diagonal (E,E) weight in (in, out) orientation so
    # the kernel computes x @ W_bd with a natural contraction.
    wq_bd = (jnp.kron(eye, wq.T) * scale).astype(mxu_dtype)   # scale folded in
    wk_bd = jnp.kron(eye, wk.T).astype(mxu_dtype)
    wv_bd = jnp.kron(eye, wv.T).astype(mxu_dtype)
    wo_t = params["w_out"].T.astype(mxu_dtype)                # (in, out)
    b = params["b_out"].reshape(1, -1).astype(jnp.float32)
    return wq_bd, wk_bd, wv_bd, wo_t, b


def multi_head_attention(query, key, value, params, *, n_heads,
                         mxu_dtype=jnp.float32):
    """Forward pass matching the PyTorch MultiHeadAttention module.

    query/key/value: (B, seq, embed_size)
    params: 'wq','wk','wv' of shape (D, D), 'w_out' (E, E), 'b_out' (E,)
    mxu_dtype: set to jnp.bfloat16 to run matmul operands in bf16 on the MXU
               (f32 accumulation); default f32 preserves exact-module parity.
    """
    B, S, E = query.shape
    assert E % n_heads == 0

    wq_bd, wk_bd, wv_bd, wo_t, b = _prepare_weights(params, n_heads, mxu_dtype)
    qkv = [x.astype(mxu_dtype) for x in (query, key, value)]

    io_block = pl.BlockSpec((1, S, E), lambda i: (i, 0, 0))    # (B,S,E), lane-dense E
    w_block = pl.BlockSpec((E, E), lambda i: (0, 0))           # resident across grid
    bias_block = pl.BlockSpec((1, E), lambda i: (0, 0))

    kernel = functools.partial(_fused_mha_kernel, n_heads=n_heads,
                               mxu_dtype=mxu_dtype)

    return pl.pallas_call(
        kernel,
        out_shape=jax.ShapeDtypeStruct((B, S, E), query.dtype),
        grid=(B,),
        in_specs=[io_block, io_block, io_block,
                  w_block, w_block, w_block, w_block, bias_block],
        out_specs=io_block,
        compiler_params=pltpu.CompilerParams(
            # Even batch extent splits cleanly across v7x's 2 TensorCores;
            # annotation is a no-op on single-TC v5e/v6e.
            dimension_semantics=("parallel",),
            vmem_limit_bytes=32 * 1024 * 1024),
    )(*qkv, wq_bd, wk_bd, wv_bd, wo_t, b)


def _reference(query, key, value, params, *, n_heads):
    """Pure-JAX reference mirroring the PyTorch forward."""
    B, S, E = query.shape
    H = n_heads
    D = E // H

    def split(x):
        return x.reshape(B, S, H, D)

    q = jnp.einsum("bshd,ed->bshe", split(query), params["wq"]).transpose(0, 2, 1, 3)
    k = jnp.einsum("bshd,ed->bshe", split(key), params["wk"]).transpose(0, 2, 1, 3)
    v = jnp.einsum("bshd,ed->bshe", split(value), params["wv"]).transpose(0, 2, 1, 3)
    attn = jnp.einsum("bhqd,bhkd->bhqk", q, k) / jnp.sqrt(jnp.float32(D))
    attn = jax.nn.softmax(attn, axis=-1)
    out = jnp.einsum("bhqk,bhkd->bhqd", attn, v).transpose(0, 2, 1, 3).reshape(B, S, E)
    return out @ params["w_out"].T + params["b_out"]


if __name__ == "__main__":
    B, S, E, H = 2, 8, 32, 4
    D = E // H

    key0 = jax.random.PRNGKey(0)
    k_q, k_k, k_v, k_wq, k_wk, k_wv, k_wo, k_bo = jax.random.split(key0, 8)

    query = jax.random.normal(k_q, (B, S, E), dtype=jnp.float32)
    key_in = jax.random.normal(k_k, (B, S, E), dtype=jnp.float32)
    value = jax.random.normal(k_v, (B, S, E), dtype=jnp.float32)

    params = {
        "wq": jax.random.normal(k_wq, (D, D), dtype=jnp.float32) / jnp.sqrt(D),
        "wk": jax.random.normal(k_wk, (D, D), dtype=jnp.float32) / jnp.sqrt(D),
        "wv": jax.random.normal(k_wv, (D, D), dtype=jnp.float32) / jnp.sqrt(D),
        "w_out": jax.random.normal(k_wo, (E, E), dtype=jnp.float32) / jnp.sqrt(E),
        "b_out": jax.random.normal(k_bo, (E,), dtype=jnp.float32) * 0.01,
    }

    out = multi_head_attention(query, key_in, value, params, n_heads=H)
    out = jax.block_until_ready(out)

    ref = _reference(query, key_in, value, params, n_heads=H)
    # Tolerance accommodates the EUP approximate reciprocal in the softmax.
    np.testing.assert_allclose(np.asarray(out), np.asarray(ref),
                               rtol=5e-3, atol=5e-3)

    print("KERNEL_OK")
</pallas_src>

<mosaic_0001>
module attributes {stable_mosaic.version = 11 : i64} {
  func.func @_fused_mha_kernel(%arg0: i32, %arg1: memref<1x8x32xf32, #tpu.memory_space<vmem>>, %arg2: memref<1x8x32xf32, #tpu.memory_space<vmem>>, %arg3: memref<1x8x32xf32, #tpu.memory_space<vmem>>, %arg4: memref<32x32xf32, #tpu.memory_space<vmem>>, %arg5: memref<32x32xf32, #tpu.memory_space<vmem>>, %arg6: memref<32x32xf32, #tpu.memory_space<vmem>>, %arg7: memref<32x32xf32, #tpu.memory_space<vmem>>, %arg8: memref<1x32xf32, #tpu.memory_space<vmem>>, %arg9: memref<1x8x32xf32, #tpu.memory_space<vmem>>) attributes {dimension_semantics = [#tpu.dimension_semantics<parallel>], iteration_bounds = array<i64: 2>, scalar_prefetch = 0 : i64, scratch_operands = 0 : i64, tpu.core_type = #tpu.core_type<tc>, window_params = [{transform_indices = @transform_0, window_bounds = array<i64: 1, 8, 32>}, {transform_indices = @transform_1, window_bounds = array<i64: 1, 8, 32>}, {transform_indices = @transform_2, window_bounds = array<i64: 1, 8, 32>}, {pipeline_mode = #tpu.pipeline_mode<synchronous>, transform_indices = @transform_3, window_bounds = array<i64: 32, 32>}, {pipeline_mode = #tpu.pipeline_mode<synchronous>, transform_indices = @transform_4, window_bounds = array<i64: 32, 32>}, {pipeline_mode = #tpu.pipeline_mode<synchronous>, transform_indices = @transform_5, window_bounds = array<i64: 32, 32>}, {pipeline_mode = #tpu.pipeline_mode<synchronous>, transform_indices = @transform_6, window_bounds = array<i64: 32, 32>}, {pipeline_mode = #tpu.pipeline_mode<synchronous>, transform_indices = @transform_7, window_bounds = array<i64: 1, 32>}, {transform_indices = @transform_8, window_bounds = array<i64: 1, 8, 32>}]} {
    %c0 = arith.constant 0 : index
    %c0_0 = arith.constant 0 : index
    %c0_1 = arith.constant 0 : index
    %0 = vector.load %arg1[%c0, %c0_0, %c0_1] : memref<1x8x32xf32, #tpu.memory_space<vmem>>, vector<1x8x32xf32>
    %1 = vector.shape_cast %0 : vector<1x8x32xf32> to vector<8x32xf32>
    %c0_2 = arith.constant 0 : index
    %c0_3 = arith.constant 0 : index
    %c0_4 = arith.constant 0 : index
    %2 = vector.load %arg2[%c0_2, %c0_3, %c0_4] : memref<1x8x32xf32, #tpu.memory_space<vmem>>, vector<1x8x32xf32>
    %3 = vector.shape_cast %2 : vector<1x8x32xf32> to vector<8x32xf32>
    %c0_5 = arith.constant 0 : index
    %c0_6 = arith.constant 0 : index
    %c0_7 = arith.constant 0 : index
    %4 = vector.load %arg3[%c0_5, %c0_6, %c0_7] : memref<1x8x32xf32, #tpu.memory_space<vmem>>, vector<1x8x32xf32>
    %5 = vector.shape_cast %4 : vector<1x8x32xf32> to vector<8x32xf32>
    %c0_8 = arith.constant 0 : index
    %c0_9 = arith.constant 0 : index
    %6 = vector.load %arg4[%c0_8, %c0_9] : memref<32x32xf32, #tpu.memory_space<vmem>>, vector<32x32xf32>
    %cst = arith.constant dense<0.000000e+00> : vector<8x32xf32>
    %7 = tpu.matmul %1, %6, %cst {dimension_numbers = #tpu.dot_dimension_numbers<[1], [0], [0], [1], [0, 0, 1, 1], [], []>} : vector<8x32xf32>, vector<32x32xf32>, vector<8x32xf32> -> vector<8x32xf32>
    %c0_10 = arith.constant 0 : index
    %c0_11 = arith.constant 0 : index
    %8 = vector.load %arg5[%c0_10, %c0_11] : memref<32x32xf32, #tpu.memory_space<vmem>>, vector<32x32xf32>
    %cst_12 = arith.constant dense<0.000000e+00> : vector<8x32xf32>
    %9 = tpu.matmul %3, %8, %cst_12 {dimension_numbers = #tpu.dot_dimension_numbers<[1], [0], [0], [1], [0, 0, 1, 1], [], []>} : vector<8x32xf32>, vector<32x32xf32>, vector<8x32xf32> -> vector<8x32xf32>
    %c0_13 = arith.constant 0 : index
    %c0_14 = arith.constant 0 : index
    %10 = vector.load %arg6[%c0_13, %c0_14] : memref<32x32xf32, #tpu.memory_space<vmem>>, vector<32x32xf32>
    %cst_15 = arith.constant dense<0.000000e+00> : vector<8x32xf32>
    %11 = tpu.matmul %5, %10, %cst_15 {dimension_numbers = #tpu.dot_dimension_numbers<[1], [0], [0], [1], [0, 0, 1, 1], [], []>} : vector<8x32xf32>, vector<32x32xf32>, vector<8x32xf32> -> vector<8x32xf32>
    %c0_16 = arith.constant 0 : index
    %c0_17 = arith.constant 0 : index
    %12 = vector.load %arg7[%c0_16, %c0_17] : memref<32x32xf32, #tpu.memory_space<vmem>>, vector<32x32xf32>
    %cst_18 = arith.constant 0.000000e+00 : f32
    %13 = vector.broadcast %cst_18 : f32 to vector<8x32xf32>
    %14 = vector.extract_strided_slice %7 {offsets = [0, 0], sizes = [8, 8], strides = [1, 1]} : vector<8x32xf32> to vector<8x8xf32>
    %15 = vector.extract_strided_slice %9 {offsets = [0, 0], sizes = [8, 8], strides = [1, 1]} : vector<8x32xf32> to vector<8x8xf32>
    %16 = vector.extract_strided_slice %11 {offsets = [0, 0], sizes = [8, 8], strides = [1, 1]} : vector<8x32xf32> to vector<8x8xf32>
    %17 = tpu.transpose %15, [1, 0] : vector<8x8xf32> -> vector<8x8xf32>
    %cst_19 = arith.constant dense<0.000000e+00> : vector<8x8xf32>
    %18 = tpu.matmul %14, %17, %cst_19 {dimension_numbers = #tpu.dot_dimension_numbers<[1], [0], [0], [1], [0, 0, 1, 1], [], []>} : vector<8x8xf32>, vector<8x8xf32>, vector<8x8xf32> -> vector<8x8xf32>
    %cst_20 = arith.constant dense<0xFF800000> : vector<8xf32>
    %19 = vector.multi_reduction <maximumf>, %18, %cst_20 [1] : vector<8x8xf32> to vector<8xf32>
    %20 = vector.shape_cast %19 : vector<8xf32> to vector<8x1xf32>
    %21 = vector.broadcast %20 : vector<8x1xf32> to vector<8x8xf32>
    %22 = arith.subf %18, %21 : vector<8x8xf32>
    %23 = math.exp %22 : vector<8x8xf32>
    %cst_21 = arith.constant dense<0.000000e+00> : vector<8xf32>
    %24 = vector.multi_reduction <add>, %23, %cst_21 [1] : vector<8x8xf32> to vector<8xf32>
    %25 = vector.shape_cast %24 : vector<8xf32> to vector<8x1xf32>
    %26 = tpu.reciprocal %25 {approx = true} : vector<8x1xf32> -> vector<8x1xf32>
    %27 = vector.broadcast %26 : vector<8x1xf32> to vector<8x8xf32>
    %28 = arith.mulf %23, %27 : vector<8x8xf32>
    %cst_22 = arith.constant dense<0.000000e+00> : vector<8x8xf32>
    %29 = tpu.matmul %28, %16, %cst_22 {dimension_numbers = #tpu.dot_dimension_numbers<[1], [0], [0], [1], [0, 0, 1, 1], [], []>} : vector<8x8xf32>, vector<8x8xf32>, vector<8x8xf32> -> vector<8x8xf32>
    %30 = vector.extract_strided_slice %12 {offsets = [0, 0], sizes = [8, 32], strides = [1, 1]} : vector<32x32xf32> to vector<8x32xf32>
    %cst_23 = arith.constant dense<0.000000e+00> : vector<8x32xf32>
    %31 = tpu.matmul %29, %30, %cst_23 {dimension_numbers = #tpu.dot_dimension_numbers<[1], [0], [0], [1], [0, 0, 1, 1], [], []>} : vector<8x8xf32>, vector<8x32xf32>, vector<8x32xf32> -> vector<8x32xf32>
    %32 = arith.addf %13, %31 : vector<8x32xf32>
    %33 = vector.extract_strided_slice %7 {offsets = [0, 8], sizes = [8, 8], strides = [1, 1]} : vector<8x32xf32> to vector<8x8xf32>
    %34 = vector.extract_strided_slice %9 {offsets = [0, 8], sizes = [8, 8], strides = [1, 1]} : vector<8x32xf32> to vector<8x8xf32>
    %35 = vector.extract_strided_slice %11 {offsets = [0, 8], sizes = [8, 8], strides = [1, 1]} : vector<8x32xf32> to vector<8x8xf32>
    %36 = tpu.transpose %34, [1, 0] : vector<8x8xf32> -> vector<8x8xf32>
    %cst_24 = arith.constant dense<0.000000e+00> : vector<8x8xf32>
    %37 = tpu.matmul %33, %36, %cst_24 {dimension_numbers = #tpu.dot_dimension_numbers<[1], [0], [0], [1], [0, 0, 1, 1], [], []>} : vector<8x8xf32>, vector<8x8xf32>, vector<8x8xf32> -> vector<8x8xf32>
    %cst_25 = arith.constant dense<0xFF800000> : vector<8xf32>
    %38 = vector.multi_reduction <maximumf>, %37, %cst_25 [1] : vector<8x8xf32> to vector<8xf32>
    %39 = vector.shape_cast %38 : vector<8xf32> to vector<8x1xf32>
    %40 = vector.broadcast %39 : vector<8x1xf32> to vector<8x8xf32>
    %41 = arith.subf %37, %40 : vector<8x8xf32>
    %42 = math.exp %41 : vector<8x8xf32>
    %cst_26 = arith.constant dense<0.000000e+00> : vector<8xf32>
    %43 = vector.multi_reduction <add>, %42, %cst_26 [1] : vector<8x8xf32> to vector<8xf32>
    %44 = vector.shape_cast %43 : vector<8xf32> to vector<8x1xf32>
    %45 = tpu.reciprocal %44 {approx = true} : vector<8x1xf32> -> vector<8x1xf32>
    %46 = vector.broadcast %45 : vector<8x1xf32> to vector<8x8xf32>
    %47 = arith.mulf %42, %46 : vector<8x8xf32>
    %cst_27 = arith.constant dense<0.000000e+00> : vector<8x8xf32>
    %48 = tpu.matmul %47, %35, %cst_27 {dimension_numbers = #tpu.dot_dimension_numbers<[1], [0], [0], [1], [0, 0, 1, 1], [], []>} : vector<8x8xf32>, vector<8x8xf32>, vector<8x8xf32> -> vector<8x8xf32>
    %49 = vector.extract_strided_slice %12 {offsets = [8, 0], sizes = [8, 32], strides = [1, 1]} : vector<32x32xf32> to vector<8x32xf32>
    %cst_28 = arith.constant dense<0.000000e+00> : vector<8x32xf32>
    %50 = tpu.matmul %48, %49, %cst_28 {dimension_numbers = #tpu.dot_dimension_numbers<[1], [0], [0], [1], [0, 0, 1, 1], [], []>} : vector<8x8xf32>, vector<8x32xf32>, vector<8x32xf32> -> vector<8x32xf32>
    %51 = arith.addf %32, %50 : vector<8x32xf32>
    %52 = vector.extract_strided_slice %7 {offsets = [0, 16], sizes = [8, 8], strides = [1, 1]} : vector<8x32xf32> to vector<8x8xf32>
    %53 = vector.extract_strided_slice %9 {offsets = [0, 16], sizes = [8, 8], strides = [1, 1]} : vector<8x32xf32> to vector<8x8xf32>
    %54 = vector.extract_strided_slice %11 {offsets = [0, 16], sizes = [8, 8], strides = [1, 1]} : vector<8x32xf32> to vector<8x8xf32>
    %55 = tpu.transpose %53, [1, 0] : vector<8x8xf32> -> vector<8x8xf32>
    %cst_29 = arith.constant dense<0.000000e+00> : vector<8x8xf32>
    %56 = tpu.matmul %52, %55, %cst_29 {dimension_numbers = #tpu.dot_dimension_numbers<[1], [0], [0], [1], [0, 0, 1, 1], [], []>} : vector<8x8xf32>, vector<8x8xf32>, vector<8x8xf32> -> vector<8x8xf32>
    %cst_30 = arith.constant dense<0xFF800000> : vector<8xf32>
    %57 = vector.multi_reduction <maximumf>, %56, %cst_30 [1] : vector<8x8xf32> to vector<8xf32>
    %58 = vector.shape_cast %57 : vector<8xf32> to vector<8x1xf32>
    %59 = vector.broadcast %58 : vector<8x1xf32> to vector<8x8xf32>
    %60 = arith.subf %56, %59 : vector<8x8xf32>
    %61 = math.exp %60 : vector<8x8xf32>
    %cst_31 = arith.constant dense<0.000000e+00> : vector<8xf32>
    %62 = vector.multi_reduction <add>, %61, %cst_31 [1] : vector<8x8xf32> to vector<8xf32>
    %63 = vector.shape_cast %62 : vector<8xf32> to vector<8x1xf32>
    %64 = tpu.reciprocal %63 {approx = true} : vector<8x1xf32> -> vector<8x1xf32>
    %65 = vector.broadcast %64 : vector<8x1xf32> to vector<8x8xf32>
    %66 = arith.mulf %61, %65 : vector<8x8xf32>
    %cst_32 = arith.constant dense<0.000000e+00> : vector<8x8xf32>
    %67 = tpu.matmul %66, %54, %cst_32 {dimension_numbers = #tpu.dot_dimension_numbers<[1], [0], [0], [1], [0, 0, 1, 1], [], []>} : vector<8x8xf32>, vector<8x8xf32>, vector<8x8xf32> -> vector<8x8xf32>
    %68 = vector.extract_strided_slice %12 {offsets = [16, 0], sizes = [8, 32], strides = [1, 1]} : vector<32x32xf32> to vector<8x32xf32>
    %cst_33 = arith.constant dense<0.000000e+00> : vector<8x32xf32>
    %69 = tpu.matmul %67, %68, %cst_33 {dimension_numbers = #tpu.dot_dimension_numbers<[1], [0], [0], [1], [0, 0, 1, 1], [], []>} : vector<8x8xf32>, vector<8x32xf32>, vector<8x32xf32> -> vector<8x32xf32>
    %70 = arith.addf %51, %69 : vector<8x32xf32>
    %71 = vector.extract_strided_slice %7 {offsets = [0, 24], sizes = [8, 8], strides = [1, 1]} : vector<8x32xf32> to vector<8x8xf32>
    %72 = vector.extract_strided_slice %9 {offsets = [0, 24], sizes = [8, 8], strides = [1, 1]} : vector<8x32xf32> to vector<8x8xf32>
    %73 = vector.extract_strided_slice %11 {offsets = [0, 24], sizes = [8, 8], strides = [1, 1]} : vector<8x32xf32> to vector<8x8xf32>
    %74 = tpu.transpose %72, [1, 0] : vector<8x8xf32> -> vector<8x8xf32>
    %cst_34 = arith.constant dense<0.000000e+00> : vector<8x8xf32>
    %75 = tpu.matmul %71, %74, %cst_34 {dimension_numbers = #tpu.dot_dimension_numbers<[1], [0], [0], [1], [0, 0, 1, 1], [], []>} : vector<8x8xf32>, vector<8x8xf32>, vector<8x8xf32> -> vector<8x8xf32>
    %cst_35 = arith.constant dense<0xFF800000> : vector<8xf32>
    %76 = vector.multi_reduction <maximumf>, %75, %cst_35 [1] : vector<8x8xf32> to vector<8xf32>
    %77 = vector.shape_cast %76 : vector<8xf32> to vector<8x1xf32>
    %78 = vector.broadcast %77 : vector<8x1xf32> to vector<8x8xf32>
    %79 = arith.subf %75, %78 : vector<8x8xf32>
    %80 = math.exp %79 : vector<8x8xf32>
    %cst_36 = arith.constant dense<0.000000e+00> : vector<8xf32>
    %81 = vector.multi_reduction <add>, %80, %cst_36 [1] : vector<8x8xf32> to vector<8xf32>
    %82 = vector.shape_cast %81 : vector<8xf32> to vector<8x1xf32>
    %83 = tpu.reciprocal %82 {approx = true} : vector<8x1xf32> -> vector<8x1xf32>
    %84 = vector.broadcast %83 : vector<8x1xf32> to vector<8x8xf32>
    %85 = arith.mulf %80, %84 : vector<8x8xf32>
    %cst_37 = arith.constant dense<0.000000e+00> : vector<8x8xf32>
    %86 = tpu.matmul %85, %73, %cst_37 {dimension_numbers = #tpu.dot_dimension_numbers<[1], [0], [0], [1], [0, 0, 1, 1], [], []>} : vector<8x8xf32>, vector<8x8xf32>, vector<8x8xf32> -> vector<8x8xf32>
    %87 = vector.extract_strided_slice %12 {offsets = [24, 0], sizes = [8, 32], strides = [1, 1]} : vector<32x32xf32> to vector<8x32xf32>
    %cst_38 = arith.constant dense<0.000000e+00> : vector<8x32xf32>
    %88 = tpu.matmul %86, %87, %cst_38 {dimension_numbers = #tpu.dot_dimension_numbers<[1], [0], [0], [1], [0, 0, 1, 1], [], []>} : vector<8x8xf32>, vector<8x32xf32>, vector<8x32xf32> -> vector<8x32xf32>
    %89 = arith.addf %70, %88 : vector<8x32xf32>
    %c0_39 = arith.constant 0 : index
    %c0_40 = arith.constant 0 : index
    %90 = vector.load %arg8[%c0_39, %c0_40] : memref<1x32xf32, #tpu.memory_space<vmem>>, vector<1x32xf32>
    %91 = vector.broadcast %90 : vector<1x32xf32> to vector<8x32xf32>
    %92 = arith.addf %89, %91 : vector<8x32xf32>
    %c0_41 = arith.constant 0 : index
    %c0_42 = arith.constant 0 : index
    %c0_43 = arith.constant 0 : index
    %93 = vector.load %arg9[%c0_41, %c0_42, %c0_43] : memref<1x8x32xf32, #tpu.memory_space<vmem>>, vector<1x8x32xf32>
    %94 = vector.shape_cast %93 : vector<1x8x32xf32> to vector<8x32xf32>
    %95 = vector.shape_cast %92 : vector<8x32xf32> to vector<1x8x32xf32>
    tpu.vector_store %arg9[%c0_41, %c0_42, %c0_43], %95 {strides = array<i32>} : memref<1x8x32xf32, #tpu.memory_space<vmem>>, vector<1x8x32xf32>,
    return
  }
  func.func @transform_0(%arg0: i32) -> (i32, i32, i32) {
    %c0_i32 = arith.constant 0 : i32
    %c0_i32_0 = arith.constant 0 : i32
    %c0_i32_1 = arith.constant 0 : i32
    return %arg0, %c0_i32, %c0_i32_0 : i32, i32, i32
  }
  func.func @transform_1(%arg0: i32) -> (i32, i32, i32) {
    %c0_i32 = arith.constant 0 : i32
    %c0_i32_0 = arith.constant 0 : i32
    %c0_i32_1 = arith.constant 0 : i32
    return %arg0, %c0_i32, %c0_i32_0 : i32, i32, i32
  }
  func.func @transform_2(%arg0: i32) -> (i32, i32, i32) {
    %c0_i32 = arith.constant 0 : i32
    %c0_i32_0 = arith.constant 0 : i32
    %c0_i32_1 = arith.constant 0 : i32
    return %arg0, %c0_i32, %c0_i32_0 : i32, i32, i32
  }
  func.func @transform_3(%arg0: i32) -> (i32, i32) {
    %c0_i32 = arith.constant 0 : i32
    %c0_i32_0 = arith.constant 0 : i32
    %c0_i32_1 = arith.constant 0 : i32
    return %c0_i32, %c0_i32_0 : i32, i32
  }
  func.func @transform_4(%arg0: i32) -> (i32, i32) {
    %c0_i32 = arith.constant 0 : i32
    %c0_i32_0 = arith.constant 0 : i32
    %c0_i32_1 = arith.constant 0 : i32
    return %c0_i32, %c0_i32_0 : i32, i32
  }
  func.func @transform_5(%arg0: i32) -> (i32, i32) {
    %c0_i32 = arith.constant 0 : i32
    %c0_i32_0 = arith.constant 0 : i32
    %c0_i32_1 = arith.constant 0 : i32
    return %c0_i32, %c0_i32_0 : i32, i32
  }
  func.func @transform_6(%arg0: i32) -> (i32, i32) {
    %c0_i32 = arith.constant 0 : i32
    %c0_i32_0 = arith.constant 0 : i32
    %c0_i32_1 = arith.constant 0 : i32
    return %c0_i32, %c0_i32_0 : i32, i32
  }
  func.func @transform_7(%arg0: i32) -> (i32, i32) {
    %c0_i32 = arith.constant 0 : i32
    %c0_i32_0 = arith.constant 0 : i32
    %c0_i32_1 = arith.constant 0 : i32
    return %c0_i32, %c0_i32_0 : i32, i32
  }
  func.func @transform_8(%arg0: i32) -> (i32, i32, i32) {
    %c0_i32 = arith.constant 0 : i32
    %c0_i32_0 = arith.constant 0 : i32
    %c0_i32_1 = arith.constant 0 : i32
    return %arg0, %c0_i32, %c0_i32_0 : i32, i32, i32
  }
}

</mosaic_0001>

<llo_original>
// kernel: tpu_custom_call.1
$region0: #{tpu_custom_call.1}
  #allocation0 [shape = 'u32[]', space=smem, size = 0x4, offset = 0x4, fixed_abs, tag = 'smem constant byte address 0x4 - core index']
  #allocation1 [shape = 'u32[144,128]{1,0:T(1,128)}', space=vmem, size = 0x12000, scoped, tag = 'internal scratch']
  %s0 = inlined_call_operand.hbm [shape: f32[2,8,32], index: 0, kind: input, shape index: {}]
  %s1 = inlined_call_operand.hbm [shape: f32[2,8,32], index: 1, kind: input, shape index: {}]
  %s2 = inlined_call_operand.hbm [shape: f32[2,8,32], index: 2, kind: input, shape index: {}]
  %s3 = inlined_call_operand.hbm [shape: f32[32,32], index: 3, kind: input, shape index: {}]
  %s4 = inlined_call_operand.hbm [shape: f32[32,32], index: 4, kind: input, shape index: {}]
  %s5 = inlined_call_operand.hbm [shape: f32[32,32], index: 5, kind: input, shape index: {}]
  %s6 = inlined_call_operand.hbm [shape: f32[32,32], index: 6, kind: input, shape index: {}]
  %s7 = inlined_call_operand.vmem [shape: f32[1,32], index: 7, kind: input, shape index: {}]
  %s8 = inlined_call_operand.hbm [shape: f32[2,8,32], index: 8, kind: output, shape index: {}]
  %s9 = sld [smem:[#allocation0]]
  $region93: #{tpu_custom_call.1} parent=0
    _
  %s11 = ssub.s32 1, %s9
  %s12 = scalar_select 0, %s11, %s9
  $region1: #{tpu_custom_call.1} parent=0
    #allocation2 [shape = 'u8[8192]{0}', space=vmem, size = 0x2000, scoped, tag = 'input window, operand 0']
    #allocation3 [shape = 's32[2]{0}', space=sflag, size = 0x8, scoped, tag = 'scoped memory for tpu_custom_call.1']
    #allocation4 [shape = 's32[2]{0}', space=sflag, size = 0x8, scoped, tag = 'scoped memory for tpu_custom_call.1']
    #allocation5 [shape = 'u8[8192]{0}', space=vmem, size = 0x2000, scoped, tag = 'input window, operand 1']
    #allocation6 [shape = 's32[2]{0}', space=sflag, size = 0x8, scoped, tag = 'scoped memory for tpu_custom_call.1']
    #allocation7 [shape = 'u8[8192]{0}', space=vmem, size = 0x2000, scoped, tag = 'input window, operand 2']
    #allocation8 [shape = 'u8[16384]{0}', space=vmem, size = 0x4000, scoped, tag = 'input window, operand 3, single buffered']
    #allocation9 [shape = 's32[1]{0}', space=sflag, size = 0x4, scoped, tag = 'scoped memory for tpu_custom_call.1']
    #allocation10 [shape = 'u8[16384]{0}', space=vmem, size = 0x4000, scoped, tag = 'input window, operand 4, single buffered']
    #allocation11 [shape = 'u8[16384]{0}', space=vmem, size = 0x4000, scoped, tag = 'input window, operand 5, single buffered']
    #allocation12 [shape = 's32[1]{0}', space=sflag, size = 0x4, scoped, tag = 'scoped memory for tpu_custom_call.1']
    #allocation13 [shape = 'u8[16384]{0}', space=vmem, size = 0x4000, scoped, tag = 'input window, operand 6, single buffered']
    #allocation14 [shape = 'u8[8192]{0}', space=vmem, size = 0x2000, scoped, tag = 'output window, operand 0']
    %13 = vsyncpa [#allocation3], 0
    %s14 = scalar_lea.sflag [#allocation3], 1
    %15 = vsyncpa %s14, 0
    %16 = vsyncpa [#allocation6], 0
    %s17 = scalar_lea.sflag [#allocation6], 1
    %18 = vsyncpa %s17, 0
    %19 = vsyncpa [#allocation9], 0
    %20 = vsyncpa [#allocation12], 0
    %21 = vsyncpa [#allocation4], 0
    %s22 = scalar_lea.sflag [#allocation4], 1
    %23 = vsyncpa %s22, 0
    loop: start=0, step=1, limit=4
    $region2: #{tpu_custom_call.1} parent=1 // loop_pre_header
      _
    $region3: #{tpu_custom_call.1} parent=1 // loop_header
      %s25 = sphi 0, %s29
      %p26 = scmp.ge.s32.totalorder %s25, 4
      %s35 = sphi 0, %s37
      %s38 = sphi 0, %s35
      %s39 = sphi 0, %s38
      %s55 = sphi 0, %s39
      %s61 = sphi 0, %s63
      %s64 = sphi 0, %s61
      %s65 = sphi 0, %s64
      %s81 = sphi 0, %s65
      %s87 = sphi 0, %s89
      %s90 = sphi 0, %s87
      %s91 = sphi 0, %s90
      %s107 = sphi 0, %s91
      %s111 = sphi 0, %s111
      %s113 = sphi 0, %s111
      %s114 = sphi 0, %s113
      %s128 = sphi 0, %s114
      %s132 = sphi 0, %s132
      %s134 = sphi 0, %s132
      %s135 = sphi 0, %s134
      %s149 = sphi 0, %s135
      %s153 = sphi 0, %s153
      %s155 = sphi 0, %s153
      %s156 = sphi 0, %s155
      %s170 = sphi 0, %s156
      %s174 = sphi 0, %s174
      %s176 = sphi 0, %s174
      %s177 = sphi 0, %s176
      %s191 = sphi 0, %s177
      %s195 = sphi 0, %s195
      %s197 = sphi 0, %s195
      %s198 = sphi 0, %s197
      %s212 = sphi 0, %s198
      %s218 = sphi 0, %s220
      %s221 = sphi 0, %s218
      %s222 = sphi 0, %s221
      %s238 = sphi 0, %s222
    $region4: #{tpu_custom_call.1} parent=1 // loop_header_branch
      %28 = sbr.rel (%p26) target = $region8
    $region5: #{tpu_custom_call.1} parent=1 // loop_body
      %s30 = ssub.s32 %s25, 1
      %s31 = ssub.s32 %s25, 2
      %s32 = sadd.s32 %s25, 1
      %s33 = ssub.s32 %s25, %s32
      %p34 = scmp.eq.s32.totalorder %s33, 0
      %s36 = sadd.s32 %s35, 1
      %s37 = scalar_select %p34, %s35, %s36
      %p40 = pneg %p34
      %p41 = scmp.eq.s32.totalorder %s25, 1
      %p42 = por %p40, %p41
      %p43 = scmp.ne.s32.totalorder %s35, %s38
      %p44 = scmp.eq.s32.totalorder %s25, 0
      %p45 = por %p43, %p44
      %p46 = scmp.ne.s32.totalorder %s35, %s38
      %p47 = scmp.eq.s32.totalorder %s30, 1
      %p48 = por %p46, %p47
      %p49 = scmp.ne.s32.totalorder %s38, %s39
      %p50 = scmp.eq.s32.totalorder %s30, 0
      %p51 = por %p49, %p50
      %p52 = scmp.ne.s32.totalorder %s38, %s39
      %p53 = scmp.eq.s32.totalorder %s31, 1
      %p54 = por %p52, %p53
      %p56 = scmp.ne.s32.totalorder %s39, %s55
      %p57 = scmp.eq.s32.totalorder %s31, 0
      %p58 = por %p56, %p57
      %s59 = ssub.s32 %s25, %s32
      %p60 = scmp.eq.s32.totalorder %s59, 0
      %s62 = sadd.s32 %s61, 1
      %s63 = scalar_select %p60, %s61, %s62
      %p66 = pneg %p60
      %p67 = scmp.eq.s32.totalorder %s25, 1
      %p68 = por %p66, %p67
      %p69 = scmp.ne.s32.totalorder %s61, %s64
      %p70 = scmp.eq.s32.totalorder %s25, 0
      %p71 = por %p69, %p70
      %p72 = scmp.ne.s32.totalorder %s61, %s64
      %p73 = scmp.eq.s32.totalorder %s30, 1
      %p74 = por %p72, %p73
      %p75 = scmp.ne.s32.totalorder %s64, %s65
      %p76 = scmp.eq.s32.totalorder %s30, 0
      %p77 = por %p75, %p76
      %p78 = scmp.ne.s32.totalorder %s64, %s65
      %p79 = scmp.eq.s32.totalorder %s31, 1
      %p80 = por %p78, %p79
      %p82 = scmp.ne.s32.totalorder %s65, %s81
      %p83 = scmp.eq.s32.totalorder %s31, 0
      %p84 = por %p82, %p83
      %s85 = ssub.s32 %s25, %s32
      %p86 = scmp.eq.s32.totalorder %s85, 0
      %s88 = sadd.s32 %s87, 1
      %s89 = scalar_select %p86, %s87, %s88
      %p92 = pneg %p86
      %p93 = scmp.eq.s32.totalorder %s25, 1
      %p94 = por %p92, %p93
      %p95 = scmp.ne.s32.totalorder %s87, %s90
      %p96 = scmp.eq.s32.totalorder %s25, 0
      %p97 = por %p95, %p96
      %p98 = scmp.ne.s32.totalorder %s87, %s90
      %p99 = scmp.eq.s32.totalorder %s30, 1
      %p100 = por %p98, %p99
      %p101 = scmp.ne.s32.totalorder %s90, %s91
      %p102 = scmp.eq.s32.totalorder %s30, 0
      %p103 = por %p101, %p102
      %p104 = scmp.ne.s32.totalorder %s90, %s91
      %p105 = scmp.eq.s32.totalorder %s31, 1
      %p106 = por %p104, %p105
      %p108 = scmp.ne.s32.totalorder %s91, %s107
      %p109 = scmp.eq.s32.totalorder %s31, 0
      %p110 = por %p108, %p109
      %s112 = sadd.s32 %s111, 1
      %p115 = scmp.eq.s32.totalorder %s25, 1
      %p116 = scmp.ne.s32.totalorder %s111, %s113
      %p117 = scmp.eq.s32.totalorder %s25, 0
      %p118 = por %p116, %p117
      %p119 = scmp.ne.s32.totalorder %s111, %s113
      %p120 = scmp.eq.s32.totalorder %s30, 1
      %p121 = por %p119, %p120
      %p122 = scmp.ne.s32.totalorder %s113, %s114
      %p123 = scmp.eq.s32.totalorder %s30, 0
      %p124 = por %p122, %p123
      %p125 = scmp.ne.s32.totalorder %s113, %s114
      %p126 = scmp.eq.s32.totalorder %s31, 1
      %p127 = por %p125, %p126
      %p129 = scmp.ne.s32.totalorder %s114, %s128
      %p130 = scmp.eq.s32.totalorder %s31, 0
      %p131 = por %p129, %p130
      %s133 = sadd.s32 %s132, 1
      %p136 = scmp.eq.s32.totalorder %s25, 1
      %p137 = scmp.ne.s32.totalorder %s132, %s134
      %p138 = scmp.eq.s32.totalorder %s25, 0
      %p139 = por %p137, %p138
      %p140 = scmp.ne.s32.totalorder %s132, %s134
      %p141 = scmp.eq.s32.totalorder %s30, 1
      %p142 = por %p140, %p141
      %p143 = scmp.ne.s32.totalorder %s134, %s135
      %p144 = scmp.eq.s32.totalorder %s30, 0
      %p145 = por %p143, %p144
      %p146 = scmp.ne.s32.totalorder %s134, %s135
      %p147 = scmp.eq.s32.totalorder %s31, 1
      %p148 = por %p146, %p147
      %p150 = scmp.ne.s32.totalorder %s135, %s149
      %p151 = scmp.eq.s32.totalorder %s31, 0
      %p152 = por %p150, %p151
      %s154 = sadd.s32 %s153, 1
      %p157 = scmp.eq.s32.totalorder %s25, 1
      %p158 = scmp.ne.s32.totalorder %s153, %s155
      %p159 = scmp.eq.s32.totalorder %s25, 0
      %p160 = por %p158, %p159
      %p161 = scmp.ne.s32.totalorder %s153, %s155
      %p162 = scmp.eq.s32.totalorder %s30, 1
      %p163 = por %p161, %p162
      %p164 = scmp.ne.s32.totalorder %s155, %s156
      %p165 = scmp.eq.s32.totalorder %s30, 0
      %p166 = por %p164, %p165
      %p167 = scmp.ne.s32.totalorder %s155, %s156
      %p168 = scmp.eq.s32.totalorder %s31, 1
      %p169 = por %p167, %p168
      %p171 = scmp.ne.s32.totalorder %s156, %s170
      %p172 = scmp.eq.s32.totalorder %s31, 0
      %p173 = por %p171, %p172
      %s175 = sadd.s32 %s174, 1
      %p178 = scmp.eq.s32.totalorder %s25, 1
      %p179 = scmp.ne.s32.totalorder %s174, %s176
      %p180 = scmp.eq.s32.totalorder %s25, 0
      %p181 = por %p179, %p180
      %p182 = scmp.ne.s32.totalorder %s174, %s176
      %p183 = scmp.eq.s32.totalorder %s30, 1
      %p184 = por %p182, %p183
      %p185 = scmp.ne.s32.totalorder %s176, %s177
      %p186 = scmp.eq.s32.totalorder %s30, 0
      %p187 = por %p185, %p186
      %p188 = scmp.ne.s32.totalorder %s176, %s177
      %p189 = scmp.eq.s32.totalorder %s31, 1
      %p190 = por %p188, %p189
      %p192 = scmp.ne.s32.totalorder %s177, %s191
      %p193 = scmp.eq.s32.totalorder %s31, 0
      %p194 = por %p192, %p193
      %s196 = sadd.s32 %s195, 1
      %p199 = scmp.eq.s32.totalorder %s25, 1
      %p200 = scmp.ne.s32.totalorder %s195, %s197
      %p201 = scmp.eq.s32.totalorder %s25, 0
      %p202 = por %p200, %p201
      %p203 = scmp.ne.s32.totalorder %s195, %s197
      %p204 = scmp.eq.s32.totalorder %s30, 1
      %p205 = por %p203, %p204
      %p206 = scmp.ne.s32.totalorder %s197, %s198
      %p207 = scmp.eq.s32.totalorder %s30, 0
      %p208 = por %p206, %p207
      %p209 = scmp.ne.s32.totalorder %s197, %s198
      %p210 = scmp.eq.s32.totalorder %s31, 1
      %p211 = por %p209, %p210
      %p213 = scmp.ne.s32.totalorder %s198, %s212
      %p214 = scmp.eq.s32.totalorder %s31, 0
      %p215 = por %p213, %p214
      %s216 = ssub.s32 %s25, %s32
      %p217 = scmp.eq.s32.totalorder %s216, 0
      %s219 = sadd.s32 %s218, 1
      %s220 = scalar_select %p217, %s218, %s219
      %p223 = pneg %p217
      %p224 = scmp.eq.s32.totalorder %s25, 1
      %p225 = por %p223, %p224
      %p226 = scmp.ne.s32.totalorder %s218, %s221
      %p227 = scmp.eq.s32.totalorder %s25, 0
      %p228 = por %p226, %p227
      %p229 = scmp.ne.s32.totalorder %s218, %s221
      %p230 = scmp.eq.s32.totalorder %s30, 1
      %p231 = por %p229, %p230
      %p232 = scmp.ne.s32.totalorder %s221, %s222
      %p233 = scmp.eq.s32.totalorder %s30, 0
      %p234 = por %p232, %p233
      %p235 = scmp.ne.s32.totalorder %s221, %s222
      %p236 = scmp.eq.s32.totalorder %s31, 1
      %p237 = por %p235, %p236
      %p239 = scmp.ne.s32.totalorder %s222, %s238
      %p240 = scmp.eq.s32.totalorder %s31, 0
      %p241 = por %p239, %p240
      %p242 = scmp.le.s32.totalorder 1, %s25
      %p243 = scmp.lt.s32.totalorder %s25, 3
      %p244 = pnand %p242, %p243
      %p245 = pneg %p244
      // Predicated region
      $region9: #{tpu_custom_call.1} parent=5 // pred_check
        _
      $region10: #{tpu_custom_call.1} parent=5 // pred_check_branch
        %247 = sbr.rel (%p244) target = $region12
      $region11: #{tpu_custom_call.1} parent=5 // pred_region
        %s248 = ssub.s32 %s25, 1
        // Predicated region
        $region13: #{tpu_custom_call.1} parent=11 // pred_check
          %p249 = pneg %p124
        $region14: #{tpu_custom_call.1} parent=11 // pred_check_branch
          %251 = sbr.rel (%p249) target = $region16
        $region15: #{tpu_custom_call.1} parent=11 // pred_region
          %s253 = ssub.s32 512, 512
          %254 = vsyncadd [#allocation9], %s253
          %s255 = sshll.u32 [#allocation8], 4
          %s256 = int_to_ptr.vmem [resolvable:$true] %s255
          %261 = dma.hbm_to_vmem [thread:$0]  %s3, 512, %s256, [#allocation9], 128, 128, 8
        $region16: #{tpu_custom_call.1} parent=11 // pred_fallthru
          _
        // Predicated region
        $region17: #{tpu_custom_call.1} parent=11 // pred_check
          %p262 = pneg %p145
        $region18: #{tpu_custom_call.1} parent=11 // pred_check_branch
          %264 = sbr.rel (%p262) target = $region20
        $region19: #{tpu_custom_call.1} parent=11 // pred_region
          %s266 = ssub.s32 512, 512
          %267 = vsyncadd [#allocation9], %s266
          %s268 = sshll.u32 [#allocation10], 4
          %s269 = int_to_ptr.vmem [resolvable:$true] %s268
          %274 = dma.hbm_to_vmem [thread:$0]  %s4, 512, %s269, [#allocation9], 128, 128, 8
        $region20: #{tpu_custom_call.1} parent=11 // pred_fallthru
          _
        // Predicated region
        $region21: #{tpu_custom_call.1} parent=11 // pred_check
          %p275 = pneg %p166
        $region22: #{tpu_custom_call.1} parent=11 // pred_check_branch
          %277 = sbr.rel (%p275) target = $region24
        $region23: #{tpu_custom_call.1} parent=11 // pred_region
          %s279 = ssub.s32 512, 512
          %280 = vsyncadd [#allocation12], %s279
          %s281 = sshll.u32 [#allocation11], 4
          %s282 = int_to_ptr.vmem [resolvable:$true] %s281
          %287 = dma.hbm_to_vmem [thread:$0]  %s5, 512, %s282, [#allocation12], 128, 128, 8
        $region24: #{tpu_custom_call.1} parent=11 // pred_fallthru
          _
        // Predicated region
        $region25: #{tpu_custom_call.1} parent=11 // pred_check
          %p288 = pneg %p187
        $region26: #{tpu_custom_call.1} parent=11 // pred_check_branch
          %290 = sbr.rel (%p288) target = $region28
        $region27: #{tpu_custom_call.1} parent=11 // pred_region
          %s292 = ssub.s32 512, 512
          %293 = vsyncadd [#allocation12], %s292
          %s294 = sshll.u32 [#allocation13], 4
          %s295 = int_to_ptr.vmem [resolvable:$true] %s294
          %300 = dma.hbm_to_vmem [thread:$0]  %s6, 512, %s295, [#allocation12], 128, 128, 8
        $region28: #{tpu_custom_call.1} parent=11 // pred_fallthru
          _
        // Predicated region
        $region29: #{tpu_custom_call.1} parent=11 // pred_check
          %p301 = pneg %p208
        $region30: #{tpu_custom_call.1} parent=11 // pred_check_branch
          %303 = sbr.rel (%p301) target = $region32
        $region31: #{tpu_custom_call.1} parent=11 // pred_region
          _
        $region32: #{tpu_custom_call.1} parent=11 // pred_fallthru
          _
      $region12: #{tpu_custom_call.1} parent=5 // pred_fallthru
        _
      %p304 = scmp.lt.s32.totalorder %s25, 2
      // Predicated region
      $region33: #{tpu_custom_call.1} parent=5 // pred_check
        %p305 = pneg %p304
      $region34: #{tpu_custom_call.1} parent=5 // pred_check_branch
        %307 = sbr.rel (%p305) target = $region36
      $region35: #{tpu_custom_call.1} parent=5 // pred_region
        // Predicated region
        $region37: #{tpu_custom_call.1} parent=35 // pred_check
          %p308 = pneg %p45
        $region38: #{tpu_custom_call.1} parent=35 // pred_check_branch
          %310 = sbr.rel (%p308) target = $region40
        $region39: #{tpu_custom_call.1} parent=35 // pred_region
          %s311 = sand.u32 %s35, 1
          %s312 = scalar_lea.sflag [#allocation3], %s311
          %s313 = sand.u32 %s35, 1
          %s314 = smul.addr %s313, 8
          %s315 = scalar_lea.vmem [#allocation2], %s314
          %s317 = ssub.s32 128, 128
          %318 = vsyncadd %s312, %s317
          %s319 = smul.addr %s25, 128
          %s320 = scalar_lea.hbm %s0, %s319
          %s322 = sshll.u32 %s315, 4
          %s323 = int_to_ptr.vmem [resolvable:$true] %s322
          %325 = dma.hbm_to_vmem [thread:$0]  %s320, 128, %s323, %s312
        $region40: #{tpu_custom_call.1} parent=35 // pred_fallthru
          _
        // Predicated region
        $region41: #{tpu_custom_call.1} parent=35 // pred_check
          %p326 = pneg %p71
        $region42: #{tpu_custom_call.1} parent=35 // pred_check_branch
          %328 = sbr.rel (%p326) target = $region44
        $region43: #{tpu_custom_call.1} parent=35 // pred_region
          %s329 = sand.u32 %s25, 1
          %s330 = scalar_lea.sflag [#allocation6], %s329
          %s331 = sand.u32 %s61, 1
          %s332 = smul.addr %s331, 8
          %s333 = scalar_lea.vmem [#allocation5], %s332
          %s335 = ssub.s32 128, 128
          %336 = vsyncadd %s330, %s335
          %s337 = smul.addr %s25, 128
          %s338 = scalar_lea.hbm %s1, %s337
          %s340 = sshll.u32 %s333, 4
          %s341 = int_to_ptr.vmem [resolvable:$true] %s340
          %343 = dma.hbm_to_vmem [thread:$0]  %s338, 128, %s341, %s330
        $region44: #{tpu_custom_call.1} parent=35 // pred_fallthru
          _
        // Predicated region
        $region45: #{tpu_custom_call.1} parent=35 // pred_check
          %p344 = pneg %p97
        $region46: #{tpu_custom_call.1} parent=35 // pred_check_branch
          %346 = sbr.rel (%p344) target = $region48
        $region47: #{tpu_custom_call.1} parent=35 // pred_region
          %s347 = sand.u32 %s25, 1
          %s348 = scalar_lea.sflag [#allocation6], %s347
          %s349 = sand.u32 %s87, 1
          %s350 = smul.addr %s349, 8
          %s351 = scalar_lea.vmem [#allocation7], %s350
          %s353 = ssub.s32 128, 128
          %354 = vsyncadd %s348, %s353
          %s355 = smul.addr %s25, 128
          %s356 = scalar_lea.hbm %s2, %s355
          %s358 = sshll.u32 %s351, 4
          %s359 = int_to_ptr.vmem [resolvable:$true] %s358
          %361 = dma.hbm_to_vmem [thread:$0]  %s356, 128, %s359, %s348
        $region48: #{tpu_custom_call.1} parent=35 // pred_fallthru
          _
      $region36: #{tpu_custom_call.1} parent=5 // pred_fallthru
        _
      %p362 = scmp.le.s32.totalorder 1, %s25
      %p363 = scmp.lt.s32.totalorder %s25, 3
      %p364 = pnand %p362, %p363
      %p365 = pneg %p364
      // Predicated region
      $region49: #{tpu_custom_call.1} parent=5 // pred_check
        _
      $region50: #{tpu_custom_call.1} parent=5 // pred_check_branch
        %367 = sbr.rel (%p364) target = $region52
      $region51: #{tpu_custom_call.1} parent=5 // pred_region
        %s368 = ssub.s32 %s25, 1
        %s369 = sand.u32 %s38, 1
        %s370 = scalar_lea.sflag [#allocation3], %s369
        %s371 = sand.u32 %s38, 1
        %s372 = smul.addr %s371, 8
        %s373 = scalar_lea.vmem [#allocation2], %s372
        // Predicated region
        $region53: #{tpu_custom_call.1} parent=51 // pred_check
          %p374 = pneg %p51
        $region54: #{tpu_custom_call.1} parent=51 // pred_check_branch
          %376 = sbr.rel (%p374) target = $region56
        $region55: #{tpu_custom_call.1} parent=51 // pred_region
          %377 = dma.done %s370, 128
        $region56: #{tpu_custom_call.1} parent=51 // pred_fallthru
          _
        %s378 = sand.u32 %s30, 1
        %s379 = scalar_lea.sflag [#allocation6], %s378
        %s380 = sand.u32 %s64, 1
        %s381 = smul.addr %s380, 8
        %s382 = scalar_lea.vmem [#allocation5], %s381
        // Predicated region
        $region57: #{tpu_custom_call.1} parent=51 // pred_check
          %p383 = pneg %p77
        $region58: #{tpu_custom_call.1} parent=51 // pred_check_branch
          %385 = sbr.rel (%p383) target = $region60
        $region59: #{tpu_custom_call.1} parent=51 // pred_region
          %386 = dma.done %s379, 128
        $region60: #{tpu_custom_call.1} parent=51 // pred_fallthru
          _
        %s387 = sand.u32 %s30, 1
        %s388 = scalar_lea.sflag [#allocation6], %s387
        %s389 = sand.u32 %s90, 1
        %s390 = smul.addr %s389, 8
        %s391 = scalar_lea.vmem [#allocation7], %s390
        // Predicated region
        $region61: #{tpu_custom_call.1} parent=51 // pred_check
          %p392 = pneg %p103
        $region62: #{tpu_custom_call.1} parent=51 // pred_check_branch
          %394 = sbr.rel (%p392) target = $region64
        $region63: #{tpu_custom_call.1} parent=51 // pred_region
          %395 = dma.done %s388, 128
        $region64: #{tpu_custom_call.1} parent=51 // pred_fallthru
          _
        // Predicated region
        $region65: #{tpu_custom_call.1} parent=51 // pred_check
          %p396 = pneg %p124
        $region66: #{tpu_custom_call.1} parent=51 // pred_check_branch
          %398 = sbr.rel (%p396) target = $region68
        $region67: #{tpu_custom_call.1} parent=51 // pred_region
          %399 = dma.done [#allocation9], 512
        $region68: #{tpu_custom_call.1} parent=51 // pred_fallthru
          _
        // Predicated region
        $region69: #{tpu_custom_call.1} parent=51 // pred_check
          %p400 = pneg %p145
        $region70: #{tpu_custom_call.1} parent=51 // pred_check_branch
          %402 = sbr.rel (%p400) target = $region72
        $region71: #{tpu_custom_call.1} parent=51 // pred_region
          %403 = dma.done [#allocation9], 512
        $region72: #{tpu_custom_call.1} parent=51 // pred_fallthru
          _
        // Predicated region
        $region73: #{tpu_custom_call.1} parent=51 // pred_check
          %p404 = pneg %p166
        $region74: #{tpu_custom_call.1} parent=51 // pred_check_branch
          %406 = sbr.rel (%p404) target = $region76
        $region75: #{tpu_custom_call.1} parent=51 // pred_region
          %407 = dma.done [#allocation12], 512
        $region76: #{tpu_custom_call.1} parent=51 // pred_fallthru
          _
        // Predicated region
        $region77: #{tpu_custom_call.1} parent=51 // pred_check
          %p408 = pneg %p187
        $region78: #{tpu_custom_call.1} parent=51 // pred_check_branch
          %410 = sbr.rel (%p408) target = $region80
        $region79: #{tpu_custom_call.1} parent=51 // pred_region
          %411 = dma.done [#allocation12], 512
        $region80: #{tpu_custom_call.1} parent=51 // pred_fallthru
          _
        %s412 = sand.u32 %s38, 1
        %s413 = scalar_lea.sflag [#allocation3], %s412
        %s414 = sand.u32 %s38, 1
        %s415 = smul.addr %s414, 8
        %s416 = scalar_lea.vmem [#allocation2], %s415
        %p417 = pneg %p51
        %p418 = pneg %p48
        %s419 = sand.u32 %s30, 1
        %s420 = scalar_lea.sflag [#allocation6], %s419
        %s421 = sand.u32 %s64, 1
        %s422 = smul.addr %s421, 8
        %s423 = scalar_lea.vmem [#allocation5], %s422
        %p424 = pneg %p77
        %p425 = pneg %p74
        %s426 = sand.u32 %s30, 1
        %s427 = scalar_lea.sflag [#allocation6], %s426
        %s428 = sand.u32 %s90, 1
        %s429 = smul.addr %s428, 8
        %s430 = scalar_lea.vmem [#allocation7], %s429
        %p431 = pneg %p103
        %p432 = pneg %p100
        %p433 = pneg %p124
        %p434 = pneg %p121
        %p435 = pneg %p145
        %p436 = pneg %p142
        %p437 = pneg %p166
        %p438 = pneg %p163
        %p439 = pneg %p187
        %p440 = pneg %p184
        %p441 = pneg %p208
        %p442 = pneg %p205
        %p443 = pneg %p234
        %p444 = pneg %p231
        %s445 = sand.u32 %s221, 1
        %s446 = scalar_lea.sflag [#allocation4], %s445
        %s447 = sand.u32 %s221, 1
        %s448 = smul.addr %s447, 8
        %s449 = scalar_lea.vmem [#allocation14], %s448
        %v450 = vld [vmem:[%s373] sm:$0xff]
        %v451 = vld [vmem:[%s382] sm:$0xff]
        %v452 = vld [vmem:[%s391] sm:$0xff]
        %v453 = vld [vmem:[#allocation8] sm:$0xff]
        %v454 = vld [vmem:[#allocation8 + $0x8] sm:$0xff]
        %v455 = vld [vmem:[#allocation8 + $0x10] sm:$0xff]
        %v456 = vld [vmem:[#allocation8 + $0x18] sm:$0xff]
        %vm457 = vcmask 261120
        %v459 = vsel %vm457, %v450, 0
        %461 = vmatprep.subr.mxu0 0.0
        %462 = vmatpush1.msra.mxu0 %v453
        %463 = vmatprep.subr.mxu0 0.0
        %464 = vmatpush1.msra.mxu0 %v454
        %465 = vmatprep.subr.mxu0 0.0
        %466 = vmatpush1.msra.mxu0 %v455
        %467 = vmatprep.subr.mxu0 0.0
        %468 = vmatpush1.msra.mxu0 %v456
        %469 = vmatprep.subr.mxu0 0.0
        %470 = vmatpush1.msra.mxu0 0.0
        %471 = vmatprep.subr.mxu0 0.0
        %472 = vmatpush1.msra.mxu0 0.0
        %473 = vmatprep.subr.mxu0 0.0
        %474 = vmatpush1.msra.mxu0 0.0
        %475 = vmatprep.subr.mxu0 0.0
        %476 = vmatpush1.msra.mxu0 0.0
        %477 = vmatprep.subr.mxu0 0.0
        %478 = vmatpush1.msra.mxu0 0.0
        %479 = vmatprep.subr.mxu0 0.0
        %480 = vmatpush1.msra.mxu0 0.0
        %481 = vmatprep.subr.mxu0 0.0
        %482 = vmatpush1.msra.mxu0 0.0
        %483 = vmatprep.subr.mxu0 0.0
        %484 = vmatpush1.msra.mxu0 0.0
        %485 = vmatprep.subr.mxu0 0.0
        %486 = vmatpush1.msra.mxu0 0.0
        %487 = vmatprep.subr.mxu0 0.0
        %488 = vmatpush1.msra.mxu0 0.0
        %489 = vmatprep.subr.mxu0 0.0
        %490 = vmatpush1.msra.mxu0 0.0
        %491 = vmatprep.subr.mxu0 0.0
        %492 = vmatpush1.msra.mxu0 0.0
        %493 = vmatprep.subr.mxu0 0.0
        %494 = vmatpush1.msra.mxu0 0.0
        %495 = vmatprep.subr.mxu0 0.0
        %496 = vmatpush1.msra.mxu0 0.0
        %497 = vmatprep.subr.mxu0 0.0
        %498 = vmatpush1.msra.mxu0 0.0
        %499 = vmatprep.subr.mxu0 0.0
        %500 = vmatpush1.msra.mxu0 0.0
        %501 = vmatprep.subr.mxu0 0.0
        %502 = vmatpush1.msra.mxu0 0.0
        %503 = vmatprep.subr.mxu0 0.0
        %504 = vmatpush1.msra.mxu0 0.0
        %505 = vmatprep.subr.mxu0 0.0
        %506 = vmatpush1.msra.mxu0 0.0
        %507 = vmatprep.subr.mxu0 0.0
        %508 = vmatpush1.msra.mxu0 0.0
        %509 = vmatprep.subr.mxu0 0.0
        %510 = vmatpush1.msra.mxu0 0.0
        %511 = vmatprep.subr.mxu0 0.0
        %512 = vmatpush1.msra.mxu0 0.0
        %513 = vmatprep.subr.mxu0 0.0
        %514 = vmatpush1.msra.mxu0 0.0
        %515 = vmatprep.subr.mxu0 0.0
        %516 = vmatpush1.msra.mxu0 0.0
        %517 = vmatprep.subr.mxu0 0.0
        %518 = vmatpush1.msra.mxu0 0.0
        %519 = vmatprep.subr.mxu0 0.0
        %520 = vmatpush1.msra.mxu0 0.0
        %521 = vmatprep.subr.mxu0 0.0
        %522 = vmatpush1.msra.mxu0 0.0
        %523 = vmatprep.subr.mxu0 0.0
        %524 = vmatpush1.msra.mxu0 0.0
        %525 = vmatprep.mubr.f32.mxu0 0.0
        %526 = vmatmul.mubr.f32.gmra.mrb[0].mxu0 %v459
        %v527 = vpop.f32.mrb[0].mxu0
        %v528 = vadd.f32 0.0, %v527
        %v529 = vpop.f32.mrb[0].mxu0
        %530 = vdwg.mxu0
        %v531 = vld [vmem:[#allocation10] sm:$0xff]
        %v532 = vld [vmem:[#allocation10 + $0x8] sm:$0xff]
        %v533 = vld [vmem:[#allocation10 + $0x10] sm:$0xff]
        %v534 = vld [vmem:[#allocation10 + $0x18] sm:$0xff]
        %v536 = vsel %vm457, %v451, 0
        %538 = vmatprep.subr.mxu0 0.0
        %539 = vmatpush1.msra.mxu0 %v531
        %540 = vmatprep.subr.mxu0 0.0
        %541 = vmatpush1.msra.mxu0 %v532
        %542 = vmatprep.subr.mxu0 0.0
        %543 = vmatpush1.msra.mxu0 %v533
        %544 = vmatprep.subr.mxu0 0.0
        %545 = vmatpush1.msra.mxu0 %v534
        %546 = vmatprep.subr.mxu0 0.0
        %547 = vmatpush1.msra.mxu0 0.0
        %548 = vmatprep.subr.mxu0 0.0
        %549 = vmatpush1.msra.mxu0 0.0
        %550 = vmatprep.subr.mxu0 0.0
        %551 = vmatpush1.msra.mxu0 0.0
        %552 = vmatprep.subr.mxu0 0.0
        %553 = vmatpush1.msra.mxu0 0.0
        %554 = vmatprep.subr.mxu0 0.0
        %555 = vmatpush1.msra.mxu0 0.0
        %556 = vmatprep.subr.mxu0 0.0
        %557 = vmatpush1.msra.mxu0 0.0
        %558 = vmatprep.subr.mxu0 0.0
        %559 = vmatpush1.msra.mxu0 0.0
        %560 = vmatprep.subr.mxu0 0.0
        %561 = vmatpush1.msra.mxu0 0.0
        %562 = vmatprep.subr.mxu0 0.0
        %563 = vmatpush1.msra.mxu0 0.0
        %564 = vmatprep.subr.mxu0 0.0
        %565 = vmatpush1.msra.mxu0 0.0
        %566 = vmatprep.subr.mxu0 0.0
        %567 = vmatpush1.msra.mxu0 0.0
        %568 = vmatprep.subr.mxu0 0.0
        %569 = vmatpush1.msra.mxu0 0.0
        %570 = vmatprep.subr.mxu0 0.0
        %571 = vmatpush1.msra.mxu0 0.0
        %572 = vmatprep.subr.mxu0 0.0
        %573 = vmatpush1.msra.mxu0 0.0
        %574 = vmatprep.subr.mxu0 0.0
        %575 = vmatpush1.msra.mxu0 0.0
        %576 = vmatprep.subr.mxu0 0.0
        %577 = vmatpush1.msra.mxu0 0.0
        %578 = vmatprep.subr.mxu0 0.0
        %579 = vmatpush1.msra.mxu0 0.0
        %580 = vmatprep.subr.mxu0 0.0
        %581 = vmatpush1.msra.mxu0 0.0
        %582 = vmatprep.subr.mxu0 0.0
        %583 = vmatpush1.msra.mxu0 0.0
        %584 = vmatprep.subr.mxu0 0.0
        %585 = vmatpush1.msra.mxu0 0.0
        %586 = vmatprep.subr.mxu0 0.0
        %587 = vmatpush1.msra.mxu0 0.0
        %588 = vmatprep.subr.mxu0 0.0
        %589 = vmatpush1.msra.mxu0 0.0
        %590 = vmatprep.subr.mxu0 0.0
        %591 = vmatpush1.msra.mxu0 0.0
        %592 = vmatprep.subr.mxu0 0.0
        %593 = vmatpush1.msra.mxu0 0.0
        %594 = vmatprep.subr.mxu0 0.0
        %595 = vmatpush1.msra.mxu0 0.0
        %596 = vmatprep.subr.mxu0 0.0
        %597 = vmatpush1.msra.mxu0 0.0
        %598 = vmatprep.subr.mxu0 0.0
        %599 = vmatpush1.msra.mxu0 0.0
        %600 = vmatprep.subr.mxu0 0.0
        %601 = vmatpush1.msra.mxu0 0.0
        %602 = vmatprep.mubr.f32.mxu0 0.0
        %603 = vmatmul.mubr.f32.gmra.mrb[0].mxu0 %v536
        %v604 = vpop.f32.mrb[0].mxu0
        %v605 = vadd.f32 0.0, %v604
        %v606 = vpop.f32.mrb[0].mxu0
        %607 = vdwg.mxu0
        %v608 = vld [vmem:[#allocation11] sm:$0xff]
        %v609 = vld [vmem:[#allocation11 + $0x8] sm:$0xff]
        %v610 = vld [vmem:[#allocation11 + $0x10] sm:$0xff]
        %v611 = vld [vmem:[#allocation11 + $0x18] sm:$0xff]
        %v613 = vsel %vm457, %v452, 0
        %615 = vmatprep.subr.mxu0 0.0
        %616 = vmatpush1.msra.mxu0 %v608
        %617 = vmatprep.subr.mxu0 0.0
        %618 = vmatpush1.msra.mxu0 %v609
        %619 = vmatprep.subr.mxu0 0.0
        %620 = vmatpush1.msra.mxu0 %v610
        %621 = vmatprep.subr.mxu0 0.0
        %622 = vmatpush1.msra.mxu0 %v611
        %623 = vmatprep.subr.mxu0 0.0
        %624 = vmatpush1.msra.mxu0 0.0
        %625 = vmatprep.subr.mxu0 0.0
        %626 = vmatpush1.msra.mxu0 0.0
        %627 = vmatprep.subr.mxu0 0.0
        %628 = vmatpush1.msra.mxu0 0.0
        %629 = vmatprep.subr.mxu0 0.0
        %630 = vmatpush1.msra.mxu0 0.0
        %631 = vmatprep.subr.mxu0 0.0
        %632 = vmatpush1.msra.mxu0 0.0
        %633 = vmatprep.subr.mxu0 0.0
        %634 = vmatpush1.msra.mxu0 0.0
        %635 = vmatprep.subr.mxu0 0.0
        %636 = vmatpush1.msra.mxu0 0.0
        %637 = vmatprep.subr.mxu0 0.0
        %638 = vmatpush1.msra.mxu0 0.0
        %639 = vmatprep.subr.mxu0 0.0
        %640 = vmatpush1.msra.mxu0 0.0
        %641 = vmatprep.subr.mxu0 0.0
        %642 = vmatpush1.msra.mxu0 0.0
        %643 = vmatprep.subr.mxu0 0.0
        %644 = vmatpush1.msra.mxu0 0.0
        %645 = vmatprep.subr.mxu0 0.0
        %646 = vmatpush1.msra.mxu0 0.0
        %647 = vmatprep.subr.mxu0 0.0
        %648 = vmatpush1.msra.mxu0 0.0
        %649 = vmatprep.subr.mxu0 0.0
        %650 = vmatpush1.msra.mxu0 0.0
        %651 = vmatprep.subr.mxu0 0.0
        %652 = vmatpush1.msra.mxu0 0.0
        %653 = vmatprep.subr.mxu0 0.0
        %654 = vmatpush1.msra.mxu0 0.0
        %655 = vmatprep.subr.mxu0 0.0
        %656 = vmatpush1.msra.mxu0 0.0
        %657 = vmatprep.subr.mxu0 0.0
        %658 = vmatpush1.msra.mxu0 0.0
        %659 = vmatprep.subr.mxu0 0.0
        %660 = vmatpush1.msra.mxu0 0.0
        %661 = vmatprep.subr.mxu0 0.0
        %662 = vmatpush1.msra.mxu0 0.0
        %663 = vmatprep.subr.mxu0 0.0
        %664 = vmatpush1.msra.mxu0 0.0
        %665 = vmatprep.subr.mxu0 0.0
        %666 = vmatpush1.msra.mxu0 0.0
        %667 = vmatprep.subr.mxu0 0.0
        %668 = vmatpush1.msra.mxu0 0.0
        %669 = vmatprep.subr.mxu0 0.0
        %670 = vmatpush1.msra.mxu0 0.0
        %671 = vmatprep.subr.mxu0 0.0
        %672 = vmatpush1.msra.mxu0 0.0
        %673 = vmatprep.subr.mxu0 0.0
        %674 = vmatpush1.msra.mxu0 0.0
        %675 = vmatprep.subr.mxu0 0.0
        %676 = vmatpush1.msra.mxu0 0.0
        %677 = vmatprep.subr.mxu0 0.0
        %678 = vmatpush1.msra.mxu0 0.0
        %679 = vmatprep.mubr.f32.mxu0 0.0
        %680 = vmatmul.mubr.f32.gmra.mrb[0].mxu0 %v613
        %v681 = vpop.f32.mrb[0].mxu0
        %v682 = vadd.f32 0.0, %v681
        %v683 = vpop.f32.mrb[0].mxu0
        %684 = vdwg.mxu0
        %v685 = vld [vmem:[#allocation13] sm:$0xff]
        %v686 = vld [vmem:[#allocation13 + $0x8] sm:$0xff]
        %v687 = vld [vmem:[#allocation13 + $0x10] sm:$0xff]
        %v688 = vld [vmem:[#allocation13 + $0x18] sm:$0xff]
        %vm689 = vcmask 64512
        %v691 = vsel %vm689, %v528, 0
        %v694 = vsel %vm689, %v605, 0
        %696 = vmatprep.subr.mxu0 0.0
        %697 = vmatpush1.xpose.msra.mxu0 %v694
        %698 = vmatprep.subr.mxu0 0.0
        %699 = vmatpush1.xpose.msra.mxu0 0.0
        %700 = vmatprep.subr.mxu0 0.0
        %701 = vmatpush1.xpose.msra.mxu0 0.0
        %702 = vmatprep.subr.mxu0 0.0
        %703 = vmatpush1.xpose.msra.mxu0 0.0
        %704 = vmatprep.subr.mxu0 0.0
        %705 = vmatpush1.xpose.msra.mxu0 0.0
        %706 = vmatprep.subr.mxu0 0.0
        %707 = vmatpush1.xpose.msra.mxu0 0.0
        %708 = vmatprep.subr.mxu0 0.0
        %709 = vmatpush1.xpose.msra.mxu0 0.0
        %710 = vmatprep.subr.mxu0 0.0
        %711 = vmatpush1.xpose.msra.mxu0 0.0
        %712 = vmatprep.subr.mxu0 0.0
        %713 = vmatpush1.xpose.msra.mxu0 0.0
        %714 = vmatprep.subr.mxu0 0.0
        %715 = vmatpush1.xpose.msra.mxu0 0.0
        %716 = vmatprep.subr.mxu0 0.0
        %717 = vmatpush1.xpose.msra.mxu0 0.0
        %718 = vmatprep.subr.mxu0 0.0
        %719 = vmatpush1.xpose.msra.mxu0 0.0
        %720 = vmatprep.subr.mxu0 0.0
        %721 = vmatpush1.xpose.msra.mxu0 0.0
        %722 = vmatprep.subr.mxu0 0.0
        %723 = vmatpush1.xpose.msra.mxu0 0.0
        %724 = vmatprep.subr.mxu0 0.0
        %725 = vmatpush1.xpose.msra.mxu0 0.0
        %726 = vmatprep.subr.mxu0 0.0
        %727 = vmatpush1.xpose.msra.mxu0 0.0
        %728 = vmatprep.subr.mxu0 0.0
        %729 = vmatpush1.xpose.msra.mxu0 0.0
        %730 = vmatprep.subr.mxu0 0.0
        %731 = vmatpush1.xpose.msra.mxu0 0.0
        %732 = vmatprep.subr.mxu0 0.0
        %733 = vmatpush1.xpose.msra.mxu0 0.0
        %734 = vmatprep.subr.mxu0 0.0
        %735 = vmatpush1.xpose.msra.mxu0 0.0
        %736 = vmatprep.subr.mxu0 0.0
        %737 = vmatpush1.xpose.msra.mxu0 0.0
        %738 = vmatprep.subr.mxu0 0.0
        %739 = vmatpush1.xpose.msra.mxu0 0.0
        %740 = vmatprep.subr.mxu0 0.0
        %741 = vmatpush1.xpose.msra.mxu0 0.0
        %742 = vmatprep.subr.mxu0 0.0
        %743 = vmatpush1.xpose.msra.mxu0 0.0
        %744 = vmatprep.subr.mxu0 0.0
        %745 = vmatpush1.xpose.msra.mxu0 0.0
        %746 = vmatprep.subr.mxu0 0.0
        %747 = vmatpush1.xpose.msra.mxu0 0.0
        %748 = vmatprep.subr.mxu0 0.0
        %749 = vmatpush1.xpose.msra.mxu0 0.0
        %750 = vmatprep.subr.mxu0 0.0
        %751 = vmatpush1.xpose.msra.mxu0 0.0
        %752 = vmatprep.subr.mxu0 0.0
        %753 = vmatpush1.xpose.msra.mxu0 0.0
        %754 = vmatprep.subr.mxu0 0.0
        %755 = vmatpush1.xpose.msra.mxu0 0.0
        %756 = vmatprep.subr.mxu0 0.0
        %757 = vmatpush1.xpose.msra.mxu0 0.0
        %758 = vmatprep.subr.mxu0 0.0
        %759 = vmatpush1.xpose.msra.mxu0 0.0
        %760 = vmatprep.mubr.f32.mxu0 0.0
        %761 = vmatmul.mubr.f32.gmra.mrb[0].mxu0 %v691
        %v762 = vpop.f32.mrb[0].mxu0
        %v763 = vadd.f32 0.0, %v762
        %v764 = vpop.f32.mrb[0].mxu0
        %765 = vdwg.mxu0
        %v766 = vsel %vm689, %v763, -inf
        %767 = vmax.xlane.f32.xlu0 %v766
        %v768 = vpop.xlane.xlu0 %767
        %v769 = vsub.f32 %v763, %v768
        %v770 = vmul.f32 %v769, 1.442695
        %v771 = vpow.pop %v770
        %v772 = vsel %vm689, %v771, 0.0
        %773 = vadd.xlane.f32.xlu0 %v772
        %v774 = vpop.xlane.xlu0 %773
        %v775 = vrcp.pop %v774
        %v776 = vmul.f32 %v771, %v775
        %v778 = vsel %vm689, %v776, 0
        %780 = vmatprep.subr.mxu0 0.0
        %781 = vmatpush1.msra.mxu0 %v682
        %782 = vmatprep.subr.mxu0 0.0
        %783 = vmatpush1.msra.mxu0 0.0
        %784 = vmatprep.subr.mxu0 0.0
        %785 = vmatpush1.msra.mxu0 0.0
        %786 = vmatprep.subr.mxu0 0.0
        %787 = vmatpush1.msra.mxu0 0.0
        %788 = vmatprep.subr.mxu0 0.0
        %789 = vmatpush1.msra.mxu0 0.0
        %790 = vmatprep.subr.mxu0 0.0
        %791 = vmatpush1.msra.mxu0 0.0
        %792 = vmatprep.subr.mxu0 0.0
        %793 = vmatpush1.msra.mxu0 0.0
        %794 = vmatprep.subr.mxu0 0.0
        %795 = vmatpush1.msra.mxu0 0.0
        %796 = vmatprep.subr.mxu0 0.0
        %797 = vmatpush1.msra.mxu0 0.0
        %798 = vmatprep.subr.mxu0 0.0
        %799 = vmatpush1.msra.mxu0 0.0
        %800 = vmatprep.subr.mxu0 0.0
        %801 = vmatpush1.msra.mxu0 0.0
        %802 = vmatprep.subr.mxu0 0.0
        %803 = vmatpush1.msra.mxu0 0.0
        %804 = vmatprep.subr.mxu0 0.0
        %805 = vmatpush1.msra.mxu0 0.0
        %806 = vmatprep.subr.mxu0 0.0
        %807 = vmatpush1.msra.mxu0 0.0
        %808 = vmatprep.subr.mxu0 0.0
        %809 = vmatpush1.msra.mxu0 0.0
        %810 = vmatprep.subr.mxu0 0.0
        %811 = vmatpush1.msra.mxu0 0.0
        %812 = vmatprep.subr.mxu0 0.0
        %813 = vmatpush1.msra.mxu0 0.0
        %814 = vmatprep.subr.mxu0 0.0
        %815 = vmatpush1.msra.mxu0 0.0
        %816 = vmatprep.subr.mxu0 0.0
        %817 = vmatpush1.msra.mxu0 0.0
        %818 = vmatprep.subr.mxu0 0.0
        %819 = vmatpush1.msra.mxu0 0.0
        %820 = vmatprep.subr.mxu0 0.0
        %821 = vmatpush1.msra.mxu0 0.0
        %822 = vmatprep.subr.mxu0 0.0
        %823 = vmatpush1.msra.mxu0 0.0
        %824 = vmatprep.subr.mxu0 0.0
        %825 = vmatpush1.msra.mxu0 0.0
        %826 = vmatprep.subr.mxu0 0.0
        %827 = vmatpush1.msra.mxu0 0.0
        %828 = vmatprep.subr.mxu0 0.0
        %829 = vmatpush1.msra.mxu0 0.0
        %830 = vmatprep.subr.mxu0 0.0
        %831 = vmatpush1.msra.mxu0 0.0
        %832 = vmatprep.subr.mxu0 0.0
        %833 = vmatpush1.msra.mxu0 0.0
        %834 = vmatprep.subr.mxu0 0.0
        %835 = vmatpush1.msra.mxu0 0.0
        %836 = vmatprep.subr.mxu0 0.0
        %837 = vmatpush1.msra.mxu0 0.0
        %838 = vmatprep.subr.mxu0 0.0
        %839 = vmatpush1.msra.mxu0 0.0
        %840 = vmatprep.subr.mxu0 0.0
        %841 = vmatpush1.msra.mxu0 0.0
        %842 = vmatprep.subr.mxu0 0.0
        %843 = vmatpush1.msra.mxu0 0.0
        %844 = vmatprep.mubr.f32.mxu0 0.0
        %845 = vmatmul.mubr.f32.gmra.mrb[0].mxu0 %v778
        %v846 = vpop.f32.mrb[0].mxu0
        %v847 = vadd.f32 0.0, %v846
        %v848 = vpop.f32.mrb[0].mxu0
        %849 = vdwg.mxu0
        %850 = vrot.lane.b32.xlu0 %v528, 120
        %v851 = vpop.permute.xlu0 %850
        %852 = vrot.lane.b32.xlu0 %v605, 120
        %v853 = vpop.permute.xlu0 %852
        %v854 = vsel %vm689, %v851, 0
        %v856 = vsel %vm689, %v853, 0
        %858 = vmatprep.subr.mxu0 0.0
        %859 = vmatpush1.xpose.msra.mxu0 %v856
        %860 = vmatprep.subr.mxu0 0.0
        %861 = vmatpush1.xpose.msra.mxu0 0.0
        %862 = vmatprep.subr.mxu0 0.0
        %863 = vmatpush1.xpose.msra.mxu0 0.0
        %864 = vmatprep.subr.mxu0 0.0
        %865 = vmatpush1.xpose.msra.mxu0 0.0
        %866 = vmatprep.subr.mxu0 0.0
        %867 = vmatpush1.xpose.msra.mxu0 0.0
        %868 = vmatprep.subr.mxu0 0.0
        %869 = vmatpush1.xpose.msra.mxu0 0.0
        %870 = vmatprep.subr.mxu0 0.0
        %871 = vmatpush1.xpose.msra.mxu0 0.0
        %872 = vmatprep.subr.mxu0 0.0
        %873 = vmatpush1.xpose.msra.mxu0 0.0
        %874 = vmatprep.subr.mxu0 0.0
        %875 = vmatpush1.xpose.msra.mxu0 0.0
        %876 = vmatprep.subr.mxu0 0.0
        %877 = vmatpush1.xpose.msra.mxu0 0.0
        %878 = vmatprep.subr.mxu0 0.0
        %879 = vmatpush1.xpose.msra.mxu0 0.0
        %880 = vmatprep.subr.mxu0 0.0
        %881 = vmatpush1.xpose.msra.mxu0 0.0
        %882 = vmatprep.subr.mxu0 0.0
        %883 = vmatpush1.xpose.msra.mxu0 0.0
        %884 = vmatprep.subr.mxu0 0.0
        %885 = vmatpush1.xpose.msra.mxu0 0.0
        %886 = vmatprep.subr.mxu0 0.0
        %887 = vmatpush1.xpose.msra.mxu0 0.0
        %888 = vmatprep.subr.mxu0 0.0
        %889 = vmatpush1.xpose.msra.mxu0 0.0
        %890 = vmatprep.subr.mxu0 0.0
        %891 = vmatpush1.xpose.msra.mxu0 0.0
        %892 = vmatprep.subr.mxu0 0.0
        %893 = vmatpush1.xpose.msra.mxu0 0.0
        %894 = vmatprep.subr.mxu0 0.0
        %895 = vmatpush1.xpose.msra.mxu0 0.0
        %896 = vmatprep.subr.mxu0 0.0
        %897 = vmatpush1.xpose.msra.mxu0 0.0
        %898 = vmatprep.subr.mxu0 0.0
        %899 = vmatpush1.xpose.msra.mxu0 0.0
        %900 = vmatprep.subr.mxu0 0.0
        %901 = vmatpush1.xpose.msra.mxu0 0.0
        %902 = vmatprep.subr.mxu0 0.0
        %903 = vmatpush1.xpose.msra.mxu0 0.0
        %904 = vmatprep.subr.mxu0 0.0
        %905 = vmatpush1.xpose.msra.mxu0 0.0
        %906 = vmatprep.subr.mxu0 0.0
        %907 = vmatpush1.xpose.msra.mxu0 0.0
        %908 = vmatprep.subr.mxu0 0.0
        %909 = vmatpush1.xpose.msra.mxu0 0.0
        %910 = vmatprep.subr.mxu0 0.0
        %911 = vmatpush1.xpose.msra.mxu0 0.0
        %912 = vmatprep.subr.mxu0 0.0
        %913 = vmatpush1.xpose.msra.mxu0 0.0
        %914 = vmatprep.subr.mxu0 0.0
        %915 = vmatpush1.xpose.msra.mxu0 0.0
        %916 = vmatprep.subr.mxu0 0.0
        %917 = vmatpush1.xpose.msra.mxu0 0.0
        %918 = vmatprep.subr.mxu0 0.0
        %919 = vmatpush1.xpose.msra.mxu0 0.0
        %920 = vmatprep.subr.mxu0 0.0
        %921 = vmatpush1.xpose.msra.mxu0 0.0
        %922 = vmatprep.mubr.f32.mxu0 0.0
        %923 = vmatmul.mubr.f32.gmra.mrb[0].mxu0 %v854
        %v924 = vpop.f32.mrb[0].mxu0
        %v925 = vadd.f32 0.0, %v924
        %v926 = vpop.f32.mrb[0].mxu0
        %927 = vdwg.mxu0
        %v928 = vsel %vm689, %v925, -inf
        %929 = vmax.xlane.f32.xlu0 %v928
        %v930 = vpop.xlane.xlu0 %929
        %v931 = vsub.f32 %v925, %v930
        %v932 = vmul.f32 %v931, 1.442695
        %v933 = vpow.pop %v932
        %v934 = vsel %vm689, %v933, 0.0
        %935 = vadd.xlane.f32.xlu0 %v934
        %v936 = vpop.xlane.xlu0 %935
        %v937 = vrcp.pop %v936
        %v938 = vmul.f32 %v933, %v937
        %940 = vrot.lane.b32.xlu0 %v682, 120
        %v941 = vpop.permute.xlu0 %940
        %v944 = vsel %vm689, %v938, 0
        %946 = vmatprep.subr.mxu0 0.0
        %947 = vmatpush1.msra.mxu0 %v941
        %948 = vmatprep.subr.mxu0 0.0
        %949 = vmatpush1.msra.mxu0 0.0
        %950 = vmatprep.subr.mxu0 0.0
        %951 = vmatpush1.msra.mxu0 0.0
        %952 = vmatprep.subr.mxu0 0.0
        %953 = vmatpush1.msra.mxu0 0.0
        %954 = vmatprep.subr.mxu0 0.0
        %955 = vmatpush1.msra.mxu0 0.0
        %956 = vmatprep.subr.mxu0 0.0
        %957 = vmatpush1.msra.mxu0 0.0
        %958 = vmatprep.subr.mxu0 0.0
        %959 = vmatpush1.msra.mxu0 0.0
        %960 = vmatprep.subr.mxu0 0.0
        %961 = vmatpush1.msra.mxu0 0.0
        %962 = vmatprep.subr.mxu0 0.0
        %963 = vmatpush1.msra.mxu0 0.0
        %964 = vmatprep.subr.mxu0 0.0
        %965 = vmatpush1.msra.mxu0 0.0
        %966 = vmatprep.subr.mxu0 0.0
        %967 = vmatpush1.msra.mxu0 0.0
        %968 = vmatprep.subr.mxu0 0.0
        %969 = vmatpush1.msra.mxu0 0.0
        %970 = vmatprep.subr.mxu0 0.0
        %971 = vmatpush1.msra.mxu0 0.0
        %972 = vmatprep.subr.mxu0 0.0
        %973 = vmatpush1.msra.mxu0 0.0
        %974 = vmatprep.subr.mxu0 0.0
        %975 = vmatpush1.msra.mxu0 0.0
        %976 = vmatprep.subr.mxu0 0.0
        %977 = vmatpush1.msra.mxu0 0.0
        %978 = vmatprep.subr.mxu0 0.0
        %979 = vmatpush1.msra.mxu0 0.0
        %980 = vmatprep.subr.mxu0 0.0
        %981 = vmatpush1.msra.mxu0 0.0
        %982 = vmatprep.subr.mxu0 0.0
        %983 = vmatpush1.msra.mxu0 0.0
        %984 = vmatprep.subr.mxu0 0.0
        %985 = vmatpush1.msra.mxu0 0.0
        %986 = vmatprep.subr.mxu0 0.0
        %987 = vmatpush1.msra.mxu0 0.0
        %988 = vmatprep.subr.mxu0 0.0
        %989 = vmatpush1.msra.mxu0 0.0
        %990 = vmatprep.subr.mxu0 0.0
        %991 = vmatpush1.msra.mxu0 0.0
        %992 = vmatprep.subr.mxu0 0.0
        %993 = vmatpush1.msra.mxu0 0.0
        %994 = vmatprep.subr.mxu0 0.0
        %995 = vmatpush1.msra.mxu0 0.0
        %996 = vmatprep.subr.mxu0 0.0
        %997 = vmatpush1.msra.mxu0 0.0
        %998 = vmatprep.subr.mxu0 0.0
        %999 = vmatpush1.msra.mxu0 0.0
        %1000 = vmatprep.subr.mxu0 0.0
        %1001 = vmatpush1.msra.mxu0 0.0
        %1002 = vmatprep.subr.mxu0 0.0
        %1003 = vmatpush1.msra.mxu0 0.0
        %1004 = vmatprep.subr.mxu0 0.0
        %1005 = vmatpush1.msra.mxu0 0.0
        %1006 = vmatprep.subr.mxu0 0.0
        %1007 = vmatpush1.msra.mxu0 0.0
        %1008 = vmatprep.subr.mxu0 0.0
        %1009 = vmatpush1.msra.mxu0 0.0
        %1010 = vmatprep.mubr.f32.mxu0 0.0
        %1011 = vmatmul.mubr.f32.gmra.mrb[0].mxu0 %v944
        %v1012 = vpop.f32.mrb[0].mxu0
        %v1013 = vadd.f32 0.0, %v1012
        %v1014 = vpop.f32.mrb[0].mxu0
        %1015 = vdwg.mxu0
        %v1017 = vsel %vm689, %v1013, 0
        %1019 = vmatprep.subr.mxu0 0.0
        %1020 = vmatpush1.msra.mxu0 %v686
        %1021 = vmatprep.subr.mxu0 0.0
        %1022 = vmatpush1.msra.mxu0 0.0
        %1023 = vmatprep.subr.mxu0 0.0
        %1024 = vmatpush1.msra.mxu0 0.0
        %1025 = vmatprep.subr.mxu0 0.0
        %1026 = vmatpush1.msra.mxu0 0.0
        %1027 = vmatprep.subr.mxu0 0.0
        %1028 = vmatpush1.msra.mxu0 0.0
        %1029 = vmatprep.subr.mxu0 0.0
        %1030 = vmatpush1.msra.mxu0 0.0
        %1031 = vmatprep.subr.mxu0 0.0
        %1032 = vmatpush1.msra.mxu0 0.0
        %1033 = vmatprep.subr.mxu0 0.0
        %1034 = vmatpush1.msra.mxu0 0.0
        %1035 = vmatprep.subr.mxu0 0.0
        %1036 = vmatpush1.msra.mxu0 0.0
        %1037 = vmatprep.subr.mxu0 0.0
        %1038 = vmatpush1.msra.mxu0 0.0
        %1039 = vmatprep.subr.mxu0 0.0
        %1040 = vmatpush1.msra.mxu0 0.0
        %1041 = vmatprep.subr.mxu0 0.0
        %1042 = vmatpush1.msra.mxu0 0.0
        %1043 = vmatprep.subr.mxu0 0.0
        %1044 = vmatpush1.msra.mxu0 0.0
        %1045 = vmatprep.subr.mxu0 0.0
        %1046 = vmatpush1.msra.mxu0 0.0
        %1047 = vmatprep.subr.mxu0 0.0
        %1048 = vmatpush1.msra.mxu0 0.0
        %1049 = vmatprep.subr.mxu0 0.0
        %1050 = vmatpush1.msra.mxu0 0.0
        %1051 = vmatprep.subr.mxu0 0.0
        %1052 = vmatpush1.msra.mxu0 0.0
        %1053 = vmatprep.subr.mxu0 0.0
        %1054 = vmatpush1.msra.mxu0 0.0
        %1055 = vmatprep.subr.mxu0 0.0
        %1056 = vmatpush1.msra.mxu0 0.0
        %1057 = vmatprep.subr.mxu0 0.0
        %1058 = vmatpush1.msra.mxu0 0.0
        %1059 = vmatprep.subr.mxu0 0.0
        %1060 = vmatpush1.msra.mxu0 0.0
        %1061 = vmatprep.subr.mxu0 0.0
        %1062 = vmatpush1.msra.mxu0 0.0
        %1063 = vmatprep.subr.mxu0 0.0
        %1064 = vmatpush1.msra.mxu0 0.0
        %1065 = vmatprep.subr.mxu0 0.0
        %1066 = vmatpush1.msra.mxu0 0.0
        %1067 = vmatprep.subr.mxu0 0.0
        %1068 = vmatpush1.msra.mxu0 0.0
        %1069 = vmatprep.subr.mxu0 0.0
        %1070 = vmatpush1.msra.mxu0 0.0
        %1071 = vmatprep.subr.mxu0 0.0
        %1072 = vmatpush1.msra.mxu0 0.0
        %1073 = vmatprep.subr.mxu0 0.0
        %1074 = vmatpush1.msra.mxu0 0.0
        %1075 = vmatprep.subr.mxu0 0.0
        %1076 = vmatpush1.msra.mxu0 0.0
        %1077 = vmatprep.subr.mxu0 0.0
        %1078 = vmatpush1.msra.mxu0 0.0
        %1079 = vmatprep.subr.mxu0 0.0
        %1080 = vmatpush1.msra.mxu0 0.0
        %1081 = vmatprep.subr.mxu0 0.0
        %1082 = vmatpush1.msra.mxu0 0.0
        %1083 = vmatprep.mubr.f32.mxu0 0.0
        %1084 = vmatmul.mubr.f32.gmra.mrb[0].mxu0 %v1017
        %v1085 = vpop.f32.mrb[0].mxu0
        %v1086 = vadd.f32 0.0, %v1085
        %v1087 = vpop.f32.mrb[0].mxu0
        %1088 = vdwg.mxu0
        %v1090 = vsel %vm689, %v847, 0
        %1092 = vmatprep.subr.mxu0 0.0
        %1093 = vmatpush1.msra.mxu0 %v685
        %1094 = vmatprep.subr.mxu0 0.0
        %1095 = vmatpush1.msra.mxu0 0.0
        %1096 = vmatprep.subr.mxu0 0.0
        %1097 = vmatpush1.msra.mxu0 0.0
        %1098 = vmatprep.subr.mxu0 0.0
        %1099 = vmatpush1.msra.mxu0 0.0
        %1100 = vmatprep.subr.mxu0 0.0
        %1101 = vmatpush1.msra.mxu0 0.0
        %1102 = vmatprep.subr.mxu0 0.0
        %1103 = vmatpush1.msra.mxu0 0.0
        %1104 = vmatprep.subr.mxu0 0.0
        %1105 = vmatpush1.msra.mxu0 0.0
        %1106 = vmatprep.subr.mxu0 0.0
        %1107 = vmatpush1.msra.mxu0 0.0
        %1108 = vmatprep.subr.mxu0 0.0
        %1109 = vmatpush1.msra.mxu0 0.0
        %1110 = vmatprep.subr.mxu0 0.0
        %1111 = vmatpush1.msra.mxu0 0.0
        %1112 = vmatprep.subr.mxu0 0.0
        %1113 = vmatpush1.msra.mxu0 0.0
        %1114 = vmatprep.subr.mxu0 0.0
        %1115 = vmatpush1.msra.mxu0 0.0
        %1116 = vmatprep.subr.mxu0 0.0
        %1117 = vmatpush1.msra.mxu0 0.0
        %1118 = vmatprep.subr.mxu0 0.0
        %1119 = vmatpush1.msra.mxu0 0.0
        %1120 = vmatprep.subr.mxu0 0.0
        %1121 = vmatpush1.msra.mxu0 0.0
        %1122 = vmatprep.subr.mxu0 0.0
        %1123 = vmatpush1.msra.mxu0 0.0
        %1124 = vmatprep.subr.mxu0 0.0
        %1125 = vmatpush1.msra.mxu0 0.0
        %1126 = vmatprep.subr.mxu0 0.0
        %1127 = vmatpush1.msra.mxu0 0.0
        %1128 = vmatprep.subr.mxu0 0.0
        %1129 = vmatpush1.msra.mxu0 0.0
        %1130 = vmatprep.subr.mxu0 0.0
        %1131 = vmatpush1.msra.mxu0 0.0
        %1132 = vmatprep.subr.mxu0 0.0
        %1133 = vmatpush1.msra.mxu0 0.0
        %1134 = vmatprep.subr.mxu0 0.0
        %1135 = vmatpush1.msra.mxu0 0.0
        %1136 = vmatprep.subr.mxu0 0.0
        %1137 = vmatpush1.msra.mxu0 0.0
        %1138 = vmatprep.subr.mxu0 0.0
        %1139 = vmatpush1.msra.mxu0 0.0
        %1140 = vmatprep.subr.mxu0 0.0
        %1141 = vmatpush1.msra.mxu0 0.0
        %1142 = vmatprep.subr.mxu0 0.0
        %1143 = vmatpush1.msra.mxu0 0.0
        %1144 = vmatprep.subr.mxu0 0.0
        %1145 = vmatpush1.msra.mxu0 0.0
        %1146 = vmatprep.subr.mxu0 0.0
        %1147 = vmatpush1.msra.mxu0 0.0
        %1148 = vmatprep.subr.mxu0 0.0
        %1149 = vmatpush1.msra.mxu0 0.0
        %1150 = vmatprep.subr.mxu0 0.0
        %1151 = vmatpush1.msra.mxu0 0.0
        %1152 = vmatprep.subr.mxu0 0.0
        %1153 = vmatpush1.msra.mxu0 0.0
        %1154 = vmatprep.subr.mxu0 0.0
        %1155 = vmatpush1.msra.mxu0 0.0
        %1156 = vmatprep.mubr.f32.mxu0 0.0
        %1157 = vmatmul.mubr.f32.gmra.mrb[0].mxu0 %v1090
        %v1158 = vpop.f32.mrb[0].mxu0
        %v1159 = vadd.f32 %v1086, %v1158
        %v1160 = vpop.f32.mrb[0].mxu0
        %1161 = vdwg.mxu0
        %1162 = vrot.lane.b32.xlu0 %v528, 112
        %v1163 = vpop.permute.xlu0 %1162
        %1164 = vrot.lane.b32.xlu0 %v605, 112
        %v1165 = vpop.permute.xlu0 %1164
        %v1166 = vsel %vm689, %v1163, 0
        %v1168 = vsel %vm689, %v1165, 0
        %1170 = vmatprep.subr.mxu0 0.0
        %1171 = vmatpush1.xpose.msra.mxu0 %v1168
        %1172 = vmatprep.subr.mxu0 0.0
        %1173 = vmatpush1.xpose.msra.mxu0 0.0
        %1174 = vmatprep.subr.mxu0 0.0
        %1175 = vmatpush1.xpose.msra.mxu0 0.0
        %1176 = vmatprep.subr.mxu0 0.0
        %1177 = vmatpush1.xpose.msra.mxu0 0.0
        %1178 = vmatprep.subr.mxu0 0.0
        %1179 = vmatpush1.xpose.msra.mxu0 0.0
        %1180 = vmatprep.subr.mxu0 0.0
        %1181 = vmatpush1.xpose.msra.mxu0 0.0
        %1182 = vmatprep.subr.mxu0 0.0
        %1183 = vmatpush1.xpose.msra.mxu0 0.0
        %1184 = vmatprep.subr.mxu0 0.0
        %1185 = vmatpush1.xpose.msra.mxu0 0.0
        %1186 = vmatprep.subr.mxu0 0.0
        %1187 = vmatpush1.xpose.msra.mxu0 0.0
        %1188 = vmatprep.subr.mxu0 0.0
        %1189 = vmatpush1.xpose.msra.mxu0 0.0
        %1190 = vmatprep.subr.mxu0 0.0
        %1191 = vmatpush1.xpose.msra.mxu0 0.0
        %1192 = vmatprep.subr.mxu0 0.0
        %1193 = vmatpush1.xpose.msra.mxu0 0.0
        %1194 = vmatprep.subr.mxu0 0.0
        %1195 = vmatpush1.xpose.msra.mxu0 0.0
        %1196 = vmatprep.subr.mxu0 0.0
        %1197 = vmatpush1.xpose.msra.mxu0 0.0
        %1198 = vmatprep.subr.mxu0 0.0
        %1199 = vmatpush1.xpose.msra.mxu0 0.0
        %1200 = vmatprep.subr.mxu0 0.0
        %1201 = vmatpush1.xpose.msra.mxu0 0.0
        %1202 = vmatprep.subr.mxu0 0.0
        %1203 = vmatpush1.xpose.msra.mxu0 0.0
        %1204 = vmatprep.subr.mxu0 0.0
        %1205 = vmatpush1.xpose.msra.mxu0 0.0
        %1206 = vmatprep.subr.mxu0 0.0
        %1207 = vmatpush1.xpose.msra.mxu0 0.0
        %1208 = vmatprep.subr.mxu0 0.0
        %1209 = vmatpush1.xpose.msra.mxu0 0.0
        %1210 = vmatprep.subr.mxu0 0.0
        %1211 = vmatpush1.xpose.msra.mxu0 0.0
        %1212 = vmatprep.subr.mxu0 0.0
        %1213 = vmatpush1.xpose.msra.mxu0 0.0
        %1214 = vmatprep.subr.mxu0 0.0
        %1215 = vmatpush1.xpose.msra.mxu0 0.0
        %1216 = vmatprep.subr.mxu0 0.0
        %1217 = vmatpush1.xpose.msra.mxu0 0.0
        %1218 = vmatprep.subr.mxu0 0.0
        %1219 = vmatpush1.xpose.msra.mxu0 0.0
        %1220 = vmatprep.subr.mxu0 0.0
        %1221 = vmatpush1.xpose.msra.mxu0 0.0
        %1222 = vmatprep.subr.mxu0 0.0
        %1223 = vmatpush1.xpose.msra.mxu0 0.0
        %1224 = vmatprep.subr.mxu0 0.0
        %1225 = vmatpush1.xpose.msra.mxu0 0.0
        %1226 = vmatprep.subr.mxu0 0.0
        %1227 = vmatpush1.xpose.msra.mxu0 0.0
        %1228 = vmatprep.subr.mxu0 0.0
        %1229 = vmatpush1.xpose.msra.mxu0 0.0
        %1230 = vmatprep.subr.mxu0 0.0
        %1231 = vmatpush1.xpose.msra.mxu0 0.0
        %1232 = vmatprep.subr.mxu0 0.0
        %1233 = vmatpush1.xpose.msra.mxu0 0.0
        %1234 = vmatprep.mubr.f32.mxu0 0.0
        %1235 = vmatmul.mubr.f32.gmra.mrb[0].mxu0 %v1166
        %v1236 = vpop.f32.mrb[0].mxu0
        %v1237 = vadd.f32 0.0, %v1236
        %v1238 = vpop.f32.mrb[0].mxu0
        %1239 = vdwg.mxu0
        %v1240 = vsel %vm689, %v1237, -inf
        %1241 = vmax.xlane.f32.xlu0 %v1240
        %v1242 = vpop.xlane.xlu0 %1241
        %v1243 = vsub.f32 %v1237, %v1242
        %v1244 = vmul.f32 %v1243, 1.442695
        %v1245 = vpow.pop %v1244
        %v1246 = vsel %vm689, %v1245, 0.0
        %1247 = vadd.xlane.f32.xlu0 %v1246
        %v1248 = vpop.xlane.xlu0 %1247
        %v1249 = vrcp.pop %v1248
        %v1250 = vmul.f32 %v1245, %v1249
        %1251 = vrot.lane.b32.xlu0 %v682, 112
        %v1252 = vpop.permute.xlu0 %1251
        %v1255 = vsel %vm689, %v1250, 0
        %1257 = vmatprep.subr.mxu0 0.0
        %1258 = vmatpush1.msra.mxu0 %v1252
        %1259 = vmatprep.subr.mxu0 0.0
        %1260 = vmatpush1.msra.mxu0 0.0
        %1261 = vmatprep.subr.mxu0 0.0
        %1262 = vmatpush1.msra.mxu0 0.0
        %1263 = vmatprep.subr.mxu0 0.0
        %1264 = vmatpush1.msra.mxu0 0.0
        %1265 = vmatprep.subr.mxu0 0.0
        %1266 = vmatpush1.msra.mxu0 0.0
        %1267 = vmatprep.subr.mxu0 0.0
        %1268 = vmatpush1.msra.mxu0 0.0
        %1269 = vmatprep.subr.mxu0 0.0
        %1270 = vmatpush1.msra.mxu0 0.0
        %1271 = vmatprep.subr.mxu0 0.0
        %1272 = vmatpush1.msra.mxu0 0.0
        %1273 = vmatprep.subr.mxu0 0.0
        %1274 = vmatpush1.msra.mxu0 0.0
        %1275 = vmatprep.subr.mxu0 0.0
        %1276 = vmatpush1.msra.mxu0 0.0
        %1277 = vmatprep.subr.mxu0 0.0
        %1278 = vmatpush1.msra.mxu0 0.0
        %1279 = vmatprep.subr.mxu0 0.0
        %1280 = vmatpush1.msra.mxu0 0.0
        %1281 = vmatprep.subr.mxu0 0.0
        %1282 = vmatpush1.msra.mxu0 0.0
        %1283 = vmatprep.subr.mxu0 0.0
        %1284 = vmatpush1.msra.mxu0 0.0
        %1285 = vmatprep.subr.mxu0 0.0
        %1286 = vmatpush1.msra.mxu0 0.0
        %1287 = vmatprep.subr.mxu0 0.0
        %1288 = vmatpush1.msra.mxu0 0.0
        %1289 = vmatprep.subr.mxu0 0.0
        %1290 = vmatpush1.msra.mxu0 0.0
        %1291 = vmatprep.subr.mxu0 0.0
        %1292 = vmatpush1.msra.mxu0 0.0
        %1293 = vmatprep.subr.mxu0 0.0
        %1294 = vmatpush1.msra.mxu0 0.0
        %1295 = vmatprep.subr.mxu0 0.0
        %1296 = vmatpush1.msra.mxu0 0.0
        %1297 = vmatprep.subr.mxu0 0.0
        %1298 = vmatpush1.msra.mxu0 0.0
        %1299 = vmatprep.subr.mxu0 0.0
        %1300 = vmatpush1.msra.mxu0 0.0
        %1301 = vmatprep.subr.mxu0 0.0
        %1302 = vmatpush1.msra.mxu0 0.0
        %1303 = vmatprep.subr.mxu0 0.0
        %1304 = vmatpush1.msra.mxu0 0.0
        %1305 = vmatprep.subr.mxu0 0.0
        %1306 = vmatpush1.msra.mxu0 0.0
        %1307 = vmatprep.subr.mxu0 0.0
        %1308 = vmatpush1.msra.mxu0 0.0
        %1309 = vmatprep.subr.mxu0 0.0
        %1310 = vmatpush1.msra.mxu0 0.0
        %1311 = vmatprep.subr.mxu0 0.0
        %1312 = vmatpush1.msra.mxu0 0.0
        %1313 = vmatprep.subr.mxu0 0.0
        %1314 = vmatpush1.msra.mxu0 0.0
        %1315 = vmatprep.subr.mxu0 0.0
        %1316 = vmatpush1.msra.mxu0 0.0
        %1317 = vmatprep.subr.mxu0 0.0
        %1318 = vmatpush1.msra.mxu0 0.0
        %1319 = vmatprep.subr.mxu0 0.0
        %1320 = vmatpush1.msra.mxu0 0.0
        %1321 = vmatprep.mubr.f32.mxu0 0.0
        %1322 = vmatmul.mubr.f32.gmra.mrb[0].mxu0 %v1255
        %v1323 = vpop.f32.mrb[0].mxu0
        %v1324 = vadd.f32 0.0, %v1323
        %v1325 = vpop.f32.mrb[0].mxu0
        %1326 = vdwg.mxu0
        %v1328 = vsel %vm689, %v1324, 0
        %1330 = vmatprep.subr.mxu0 0.0
        %1331 = vmatpush1.msra.mxu0 %v687
        %1332 = vmatprep.subr.mxu0 0.0
        %1333 = vmatpush1.msra.mxu0 0.0
        %1334 = vmatprep.subr.mxu0 0.0
        %1335 = vmatpush1.msra.mxu0 0.0
        %1336 = vmatprep.subr.mxu0 0.0
        %1337 = vmatpush1.msra.mxu0 0.0
        %1338 = vmatprep.subr.mxu0 0.0
        %1339 = vmatpush1.msra.mxu0 0.0
        %1340 = vmatprep.subr.mxu0 0.0
        %1341 = vmatpush1.msra.mxu0 0.0
        %1342 = vmatprep.subr.mxu0 0.0
        %1343 = vmatpush1.msra.mxu0 0.0
        %1344 = vmatprep.subr.mxu0 0.0
        %1345 = vmatpush1.msra.mxu0 0.0
        %1346 = vmatprep.subr.mxu0 0.0
        %1347 = vmatpush1.msra.mxu0 0.0
        %1348 = vmatprep.subr.mxu0 0.0
        %1349 = vmatpush1.msra.mxu0 0.0
        %1350 = vmatprep.subr.mxu0 0.0
        %1351 = vmatpush1.msra.mxu0 0.0
        %1352 = vmatprep.subr.mxu0 0.0
        %1353 = vmatpush1.msra.mxu0 0.0
        %1354 = vmatprep.subr.mxu0 0.0
        %1355 = vmatpush1.msra.mxu0 0.0
        %1356 = vmatprep.subr.mxu0 0.0
        %1357 = vmatpush1.msra.mxu0 0.0
        %1358 = vmatprep.subr.mxu0 0.0
        %1359 = vmatpush1.msra.mxu0 0.0
        %1360 = vmatprep.subr.mxu0 0.0
        %1361 = vmatpush1.msra.mxu0 0.0
        %1362 = vmatprep.subr.mxu0 0.0
        %1363 = vmatpush1.msra.mxu0 0.0
        %1364 = vmatprep.subr.mxu0 0.0
        %1365 = vmatpush1.msra.mxu0 0.0
        %1366 = vmatprep.subr.mxu0 0.0
        %1367 = vmatpush1.msra.mxu0 0.0
        %1368 = vmatprep.subr.mxu0 0.0
        %1369 = vmatpush1.msra.mxu0 0.0
        %1370 = vmatprep.subr.mxu0 0.0
        %1371 = vmatpush1.msra.mxu0 0.0
        %1372 = vmatprep.subr.mxu0 0.0
        %1373 = vmatpush1.msra.mxu0 0.0
        %1374 = vmatprep.subr.mxu0 0.0
        %1375 = vmatpush1.msra.mxu0 0.0
        %1376 = vmatprep.subr.mxu0 0.0
        %1377 = vmatpush1.msra.mxu0 0.0
        %1378 = vmatprep.subr.mxu0 0.0
        %1379 = vmatpush1.msra.mxu0 0.0
        %1380 = vmatprep.subr.mxu0 0.0
        %1381 = vmatpush1.msra.mxu0 0.0
        %1382 = vmatprep.subr.mxu0 0.0
        %1383 = vmatpush1.msra.mxu0 0.0
        %1384 = vmatprep.subr.mxu0 0.0
        %1385 = vmatpush1.msra.mxu0 0.0
        %1386 = vmatprep.subr.mxu0 0.0
        %1387 = vmatpush1.msra.mxu0 0.0
        %1388 = vmatprep.subr.mxu0 0.0
        %1389 = vmatpush1.msra.mxu0 0.0
        %1390 = vmatprep.subr.mxu0 0.0
        %1391 = vmatpush1.msra.mxu0 0.0
        %1392 = vmatprep.subr.mxu0 0.0
        %1393 = vmatpush1.msra.mxu0 0.0
        %1394 = vmatprep.mubr.f32.mxu0 0.0
        %1395 = vmatmul.mubr.f32.gmra.mrb[0].mxu0 %v1328
        %v1396 = vpop.f32.mrb[0].mxu0
        %v1397 = vadd.f32 0.0, %v1396
        %v1398 = vpop.f32.mrb[0].mxu0
        %1399 = vdwg.mxu0
        %v1400 = vadd.f32 %v1159, %v1397
        %1401 = vrot.lane.b32.xlu0 %v528, 104
        %v1402 = vpop.permute.xlu0 %1401
        %1403 = vrot.lane.b32.xlu0 %v605, 104
        %v1404 = vpop.permute.xlu0 %1403
        %v1405 = vsel %vm689, %v1402, 0
        %v1407 = vsel %vm689, %v1404, 0
        %1409 = vmatprep.subr.mxu0 0.0
        %1410 = vmatpush1.xpose.msra.mxu0 %v1407
        %1411 = vmatprep.subr.mxu0 0.0
        %1412 = vmatpush1.xpose.msra.mxu0 0.0
        %1413 = vmatprep.subr.mxu0 0.0
        %1414 = vmatpush1.xpose.msra.mxu0 0.0
        %1415 = vmatprep.subr.mxu0 0.0
        %1416 = vmatpush1.xpose.msra.mxu0 0.0
        %1417 = vmatprep.subr.mxu0 0.0
        %1418 = vmatpush1.xpose.msra.mxu0 0.0
        %1419 = vmatprep.subr.mxu0 0.0
        %1420 = vmatpush1.xpose.msra.mxu0 0.0
        %1421 = vmatprep.subr.mxu0 0.0
        %1422 = vmatpush1.xpose.msra.mxu0 0.0
        %1423 = vmatprep.subr.mxu0 0.0
        %1424 = vmatpush1.xpose.msra.mxu0 0.0
        %1425 = vmatprep.subr.mxu0 0.0
        %1426 = vmatpush1.xpose.msra.mxu0 0.0
        %1427 = vmatprep.subr.mxu0 0.0
        %1428 = vmatpush1.xpose.msra.mxu0 0.0
        %1429 = vmatprep.subr.mxu0 0.0
        %1430 = vmatpush1.xpose.msra.mxu0 0.0
        %1431 = vmatprep.subr.mxu0 0.0
        %1432 = vmatpush1.xpose.msra.mxu0 0.0
        %1433 = vmatprep.subr.mxu0 0.0
        %1434 = vmatpush1.xpose.msra.mxu0 0.0
        %1435 = vmatprep.subr.mxu0 0.0
        %1436 = vmatpush1.xpose.msra.mxu0 0.0
        %1437 = vmatprep.subr.mxu0 0.0
        %1438 = vmatpush1.xpose.msra.mxu0 0.0
        %1439 = vmatprep.subr.mxu0 0.0
        %1440 = vmatpush1.xpose.msra.mxu0 0.0
        %1441 = vmatprep.subr.mxu0 0.0
        %1442 = vmatpush1.xpose.msra.mxu0 0.0
        %1443 = vmatprep.subr.mxu0 0.0
        %1444 = vmatpush1.xpose.msra.mxu0 0.0
        %1445 = vmatprep.subr.mxu0 0.0
        %1446 = vmatpush1.xpose.msra.mxu0 0.0
        %1447 = vmatprep.subr.mxu0 0.0
        %1448 = vmatpush1.xpose.msra.mxu0 0.0
        %1449 = vmatprep.subr.mxu0 0.0
        %1450 = vmatpush1.xpose.msra.mxu0 0.0
        %1451 = vmatprep.subr.mxu0 0.0
        %1452 = vmatpush1.xpose.msra.mxu0 0.0
        %1453 = vmatprep.subr.mxu0 0.0
        %1454 = vmatpush1.xpose.msra.mxu0 0.0
        %1455 = vmatprep.subr.mxu0 0.0
        %1456 = vmatpush1.xpose.msra.mxu0 0.0
        %1457 = vmatprep.subr.mxu0 0.0
        %1458 = vmatpush1.xpose.msra.mxu0 0.0
        %1459 = vmatprep.subr.mxu0 0.0
        %1460 = vmatpush1.xpose.msra.mxu0 0.0
        %1461 = vmatprep.subr.mxu0 0.0
        %1462 = vmatpush1.xpose.msra.mxu0 0.0
        %1463 = vmatprep.subr.mxu0 0.0
        %1464 = vmatpush1.xpose.msra.mxu0 0.0
        %1465 = vmatprep.subr.mxu0 0.0
        %1466 = vmatpush1.xpose.msra.mxu0 0.0
        %1467 = vmatprep.subr.mxu0 0.0
        %1468 = vmatpush1.xpose.msra.mxu0 0.0
        %1469 = vmatprep.subr.mxu0 0.0
        %1470 = vmatpush1.xpose.msra.mxu0 0.0
        %1471 = vmatprep.subr.mxu0 0.0
        %1472 = vmatpush1.xpose.msra.mxu0 0.0
        %1473 = vmatprep.mubr.f32.mxu0 0.0
        %1474 = vmatmul.mubr.f32.gmra.mrb[0].mxu0 %v1405
        %v1475 = vpop.f32.mrb[0].mxu0
        %v1476 = vadd.f32 0.0, %v1475
        %v1477 = vpop.f32.mrb[0].mxu0
        %1478 = vdwg.mxu0
        %v1479 = vsel %vm689, %v1476, -inf
        %1480 = vmax.xlane.f32.xlu0 %v1479
        %v1481 = vpop.xlane.xlu0 %1480
        %v1482 = vsub.f32 %v1476, %v1481
        %v1483 = vmul.f32 %v1482, 1.442695
        %v1484 = vpow.pop %v1483
        %v1485 = vsel %vm689, %v1484, 0.0
        %1486 = vadd.xlane.f32.xlu0 %v1485
        %v1487 = vpop.xlane.xlu0 %1486
        %v1488 = vrcp.pop %v1487
        %v1489 = vmul.f32 %v1484, %v1488
        %1490 = vrot.lane.b32.xlu0 %v682, 104
        %v1491 = vpop.permute.xlu0 %1490
        %v1494 = vsel %vm689, %v1489, 0
        %1496 = vmatprep.subr.mxu0 0.0
        %1497 = vmatpush1.msra.mxu0 %v1491
        %1498 = vmatprep.subr.mxu0 0.0
        %1499 = vmatpush1.msra.mxu0 0.0
        %1500 = vmatprep.subr.mxu0 0.0
        %1501 = vmatpush1.msra.mxu0 0.0
        %1502 = vmatprep.subr.mxu0 0.0
        %1503 = vmatpush1.msra.mxu0 0.0
        %1504 = vmatprep.subr.mxu0 0.0
        %1505 = vmatpush1.msra.mxu0 0.0
        %1506 = vmatprep.subr.mxu0 0.0
        %1507 = vmatpush1.msra.mxu0 0.0
        %1508 = vmatprep.subr.mxu0 0.0
        %1509 = vmatpush1.msra.mxu0 0.0
        %1510 = vmatprep.subr.mxu0 0.0
        %1511 = vmatpush1.msra.mxu0 0.0
        %1512 = vmatprep.subr.mxu0 0.0
        %1513 = vmatpush1.msra.mxu0 0.0
        %1514 = vmatprep.subr.mxu0 0.0
        %1515 = vmatpush1.msra.mxu0 0.0
        %1516 = vmatprep.subr.mxu0 0.0
        %1517 = vmatpush1.msra.mxu0 0.0
        %1518 = vmatprep.subr.mxu0 0.0
        %1519 = vmatpush1.msra.mxu0 0.0
        %1520 = vmatprep.subr.mxu0 0.0
        %1521 = vmatpush1.msra.mxu0 0.0
        %1522 = vmatprep.subr.mxu0 0.0
        %1523 = vmatpush1.msra.mxu0 0.0
        %1524 = vmatprep.subr.mxu0 0.0
        %1525 = vmatpush1.msra.mxu0 0.0
        %1526 = vmatprep.subr.mxu0 0.0
        %1527 = vmatpush1.msra.mxu0 0.0
        %1528 = vmatprep.subr.mxu0 0.0
        %1529 = vmatpush1.msra.mxu0 0.0
        %1530 = vmatprep.subr.mxu0 0.0
        %1531 = vmatpush1.msra.mxu0 0.0
        %1532 = vmatprep.subr.mxu0 0.0
        %1533 = vmatpush1.msra.mxu0 0.0
        %1534 = vmatprep.subr.mxu0 0.0
        %1535 = vmatpush1.msra.mxu0 0.0
        %1536 = vmatprep.subr.mxu0 0.0
        %1537 = vmatpush1.msra.mxu0 0.0
        %1538 = vmatprep.subr.mxu0 0.0
        %1539 = vmatpush1.msra.mxu0 0.0
        %1540 = vmatprep.subr.mxu0 0.0
        %1541 = vmatpush1.msra.mxu0 0.0
        %1542 = vmatprep.subr.mxu0 0.0
        %1543 = vmatpush1.msra.mxu0 0.0
        %1544 = vmatprep.subr.mxu0 0.0
        %1545 = vmatpush1.msra.mxu0 0.0
        %1546 = vmatprep.subr.mxu0 0.0
        %1547 = vmatpush1.msra.mxu0 0.0
        %1548 = vmatprep.subr.mxu0 0.0
        %1549 = vmatpush1.msra.mxu0 0.0
        %1550 = vmatprep.subr.mxu0 0.0
        %1551 = vmatpush1.msra.mxu0 0.0
        %1552 = vmatprep.subr.mxu0 0.0
        %1553 = vmatpush1.msra.mxu0 0.0
        %1554 = vmatprep.subr.mxu0 0.0
        %1555 = vmatpush1.msra.mxu0 0.0
        %1556 = vmatprep.subr.mxu0 0.0
        %1557 = vmatpush1.msra.mxu0 0.0
        %1558 = vmatprep.subr.mxu0 0.0
        %1559 = vmatpush1.msra.mxu0 0.0
        %1560 = vmatprep.mubr.f32.mxu0 0.0
        %1561 = vmatmul.mubr.f32.gmra.mrb[0].mxu0 %v1494
        %v1562 = vpop.f32.mrb[0].mxu0
        %v1563 = vadd.f32 0.0, %v1562
        %v1564 = vpop.f32.mrb[0].mxu0
        %1565 = vdwg.mxu0
        %v1567 = vsel %vm689, %v1563, 0
        %1569 = vmatprep.subr.mxu0 0.0
        %1570 = vmatpush1.msra.mxu0 %v688
        %1571 = vmatprep.subr.mxu0 0.0
        %1572 = vmatpush1.msra.mxu0 0.0
        %1573 = vmatprep.subr.mxu0 0.0
        %1574 = vmatpush1.msra.mxu0 0.0
        %1575 = vmatprep.subr.mxu0 0.0
        %1576 = vmatpush1.msra.mxu0 0.0
        %1577 = vmatprep.subr.mxu0 0.0
        %1578 = vmatpush1.msra.mxu0 0.0
        %1579 = vmatprep.subr.mxu0 0.0
        %1580 = vmatpush1.msra.mxu0 0.0
        %1581 = vmatprep.subr.mxu0 0.0
        %1582 = vmatpush1.msra.mxu0 0.0
        %1583 = vmatprep.subr.mxu0 0.0
        %1584 = vmatpush1.msra.mxu0 0.0
        %1585 = vmatprep.subr.mxu0 0.0
        %1586 = vmatpush1.msra.mxu0 0.0
        %1587 = vmatprep.subr.mxu0 0.0
        %1588 = vmatpush1.msra.mxu0 0.0
        %1589 = vmatprep.subr.mxu0 0.0
        %1590 = vmatpush1.msra.mxu0 0.0
        %1591 = vmatprep.subr.mxu0 0.0
        %1592 = vmatpush1.msra.mxu0 0.0
        %1593 = vmatprep.subr.mxu0 0.0
        %1594 = vmatpush1.msra.mxu0 0.0
        %1595 = vmatprep.subr.mxu0 0.0
        %1596 = vmatpush1.msra.mxu0 0.0
        %1597 = vmatprep.subr.mxu0 0.0
        %1598 = vmatpush1.msra.mxu0 0.0
        %1599 = vmatprep.subr.mxu0 0.0
        %1600 = vmatpush1.msra.mxu0 0.0
        %1601 = vmatprep.subr.mxu0 0.0
        %1602 = vmatpush1.msra.mxu0 0.0
        %1603 = vmatprep.subr.mxu0 0.0
        %1604 = vmatpush1.msra.mxu0 0.0
        %1605 = vmatprep.subr.mxu0 0.0
        %1606 = vmatpush1.msra.mxu0 0.0
        %1607 = vmatprep.subr.mxu0 0.0
        %1608 = vmatpush1.msra.mxu0 0.0
        %1609 = vmatprep.subr.mxu0 0.0
        %1610 = vmatpush1.msra.mxu0 0.0
        %1611 = vmatprep.subr.mxu0 0.0
        %1612 = vmatpush1.msra.mxu0 0.0
        %1613 = vmatprep.subr.mxu0 0.0
        %1614 = vmatpush1.msra.mxu0 0.0
        %1615 = vmatprep.subr.mxu0 0.0
        %1616 = vmatpush1.msra.mxu0 0.0
        %1617 = vmatprep.subr.mxu0 0.0
        %1618 = vmatpush1.msra.mxu0 0.0
        %1619 = vmatprep.subr.mxu0 0.0
        %1620 = vmatpush1.msra.mxu0 0.0
        %1621 = vmatprep.subr.mxu0 0.0
        %1622 = vmatpush1.msra.mxu0 0.0
        %1623 = vmatprep.subr.mxu0 0.0
        %1624 = vmatpush1.msra.mxu0 0.0
        %1625 = vmatprep.subr.mxu0 0.0
        %1626 = vmatpush1.msra.mxu0 0.0
        %1627 = vmatprep.subr.mxu0 0.0
        %1628 = vmatpush1.msra.mxu0 0.0
        %1629 = vmatprep.subr.mxu0 0.0
        %1630 = vmatpush1.msra.mxu0 0.0
        %1631 = vmatprep.subr.mxu0 0.0
        %1632 = vmatpush1.msra.mxu0 0.0
        %1633 = vmatprep.mubr.f32.mxu0 0.0
        %1634 = vmatmul.mubr.f32.gmra.mrb[0].mxu0 %v1567
        %v1635 = vpop.f32.mrb[0].mxu0
        %v1636 = vadd.f32 0.0, %v1635
        %v1637 = vpop.f32.mrb[0].mxu0
        %1638 = vdwg.mxu0
        %v1639 = vadd.f32 %v1400, %v1636
        %v1640 = vld [vmem:[%s7] sm:$0x1]
        %v1642 = vlaneseq
        %v1643 = vshrl.u32 %v1642, 7
        %v1644 = vsub.s32 0, %v1643
        %v1645 = vrot.slane %v1640, %v1644
        %v1647 = vadd.f32 %v1639, %v1645
        %1648 = vst.msk [vmem:[%s449] sm:$0xff] %vm457, %v1647
        %s1649 = sand.u32 %s221, 1
        %s1650 = scalar_lea.sflag [#allocation4], %s1649
        %s1651 = sand.u32 %s221, 1
        %s1652 = smul.addr %s1651, 8
        %s1653 = scalar_lea.vmem [#allocation14], %s1652
        // Predicated region
        $region81: #{tpu_custom_call.1} parent=51 // pred_check
          %p1654 = pneg %p231
        $region82: #{tpu_custom_call.1} parent=51 // pred_check_branch
          %1656 = sbr.rel (%p1654) target = $region84
        $region83: #{tpu_custom_call.1} parent=51 // pred_region
          %s1658 = ssub.s32 128, 128
          %1659 = vsyncadd %s1650, %s1658
          %s1660 = smul.addr %s30, 128
          %s1661 = scalar_lea.hbm %s8, %s1660
          %s1663 = sshll.u32 %s1653, 4
          %s1664 = int_to_ptr.vmem [resolvable:$true] %s1663
          %1666 = dma.vmem_to_hbm [thread:$0]  %s1664, 128, %s1661, %s1650
        $region84: #{tpu_custom_call.1} parent=51 // pred_fallthru
          _
      $region52: #{tpu_custom_call.1} parent=5 // pred_fallthru
        _
      %p1667 = scmp.le.s32.totalorder 2, %s25
      // Predicated region
      $region85: #{tpu_custom_call.1} parent=5 // pred_check
        %p1668 = pneg %p1667
      $region86: #{tpu_custom_call.1} parent=5 // pred_check_branch
        %1670 = sbr.rel (%p1668) target = $region88
      $region87: #{tpu_custom_call.1} parent=5 // pred_region
        %s1671 = ssub.s32 %s25, 2
        // Predicated region
        $region89: #{tpu_custom_call.1} parent=87 // pred_check
          %p1672 = pneg %p237
        $region90: #{tpu_custom_call.1} parent=87 // pred_check_branch
          %1674 = sbr.rel (%p1672) target = $region92
        $region91: #{tpu_custom_call.1} parent=87 // pred_region
          %s1675 = sand.u32 %s222, 1
          %s1676 = scalar_lea.sflag [#allocation4], %s1675
          %s1677 = sand.u32 %s222, 1
          %s1678 = smul.addr %s1677, 8
          %s1679 = scalar_lea.vmem [#allocation14], %s1678
          %1680 = dma.done %s1676, 128
        $region92: #{tpu_custom_call.1} parent=87 // pred_fallthru
          _
      $region88: #{tpu_custom_call.1} parent=5 // pred_fallthru
        _
    $region6: #{tpu_custom_call.1} parent=1 // loop_footer
      %s29 = sadd.s32 1, %s25
    $region7: #{tpu_custom_call.1} parent=1 // loop_footer_branch
      %24 = sbr.rel target = $region3
    $region8: #{tpu_custom_call.1} parent=1 // loop_exit
      _
    %1681 = vsyncpa [#allocation3], 1
    %s1682 = scalar_lea.sflag [#allocation3], 1
    %1683 = vsyncpa %s1682, 1
    %1684 = vsyncpa [#allocation6], 1
    %s1685 = scalar_lea.sflag [#allocation6], 1
    %1686 = vsyncpa %s1685, 1
    %1687 = vsyncpa [#allocation9], 1
    %1688 = vsyncpa [#allocation12], 1
    %1689 = vsyncpa [#allocation4], 1
    %s1690 = scalar_lea.sflag [#allocation4], 1
    %1691 = vsyncpa %s1690, 1

</llo_original>
